<compile_context>
chip_gen: v7x
topology: tpu7x:2x2x1
jax: 0.10.0
libtpu: 0.0.40
codegen_flags: <defaults>
</compile_context>

<pallas_src>
import jax
import jax.numpy as jnp
from jax.experimental import pallas as pl
from jax.experimental.pallas import tpu as pltpu


def _round_up(x, m):
    return ((x + m - 1) // m) * m


# ---------------------------------------------------------------------------
# Kernels
# ---------------------------------------------------------------------------

def _deconv_mm_kernel(x_ref, w_ref, b_ref, o_ref):
    # (tm, K) @ (K, tn) on the MXU, f32 accumulate, bias add, cast to out dtype.
    acc = jnp.dot(x_ref[...], w_ref[...], preferred_element_type=jnp.float32)
    o_ref[...] = (acc + b_ref[...].astype(jnp.float32)).astype(o_ref.dtype)


def _deconv_vpu_kernel(x_ref, w_ref, b_ref, o_ref):
    # Tiny K (= Cin <= 8): a (tm, K) @ (K, tn) matmul would run the MXU K
    # dimension at <3% utilization. Unroll over K and do broadcast
    # multiply-add on the VPU over the (tm, tn) accumulator instead.
    x = x_ref[...].astype(jnp.float32)
    w = w_ref[...].astype(jnp.float32)
    acc = jnp.broadcast_to(b_ref[...].astype(jnp.float32), o_ref.shape)
    for ci in range(x_ref.shape[1]):          # static unroll, K <= 8
        acc = acc + x[:, ci:ci + 1] * w[ci:ci + 1, :]
    o_ref[...] = acc.astype(o_ref.dtype)


# ---------------------------------------------------------------------------
# Tiling / VMEM budgeting
# ---------------------------------------------------------------------------

_VMEM_TILE_BUDGET = 40 * 1024 * 1024   # headroom inside v7x's 64 MiB physical VMEM


def _tile_vmem_bytes(tm, tn, K, in_itemsize, out_itemsize):
    # VMEM blocks are padded to (8, 128) tiles; account for the lane-padded K.
    k_lanes = _round_up(K, 128)
    k_sub = _round_up(K, 8)
    x_bytes = 2 * tm * k_lanes * in_itemsize      # double-buffered pixel rows
    w_bytes = 2 * k_sub * tn * in_itemsize        # weight (worst case: double buffer)
    b_bytes = 2 * 8 * tn * 4                      # bias (f32)
    o_bytes = 2 * tm * tn * out_itemsize          # double-buffered output
    return x_bytes + w_bytes + b_bytes + o_bytes


def _choose_tn(N, K, in_itemsize):
    # N is a multiple of 128 by construction. Pick the largest divisor of N
    # (multiple of 128, <= 2048) whose weight tile fits comfortably.
    best = 128
    for cand in range(128, min(N, 2048) + 1, 128):
        if N % cand == 0 and 2 * _round_up(K, 8) * cand * in_itemsize <= _VMEM_TILE_BUDGET // 2:
            best = cand
    return best


def _choose_tm(M, K, tn, in_itemsize, out_itemsize):
    tm = 2048
    while tm > 256 and _tile_vmem_bytes(tm, tn, K, in_itemsize, out_itemsize) > _VMEM_TILE_BUDGET:
        tm //= 2
    # Keep a few grid steps over M (pipeline overlap + v7x's 2 TensorCores)
    # instead of collapsing the grid to one giant tile.
    while tm > 256 and M < 2 * tm:
        tm //= 2
    return max(min(tm, _round_up(M, 8)), 8)


# ---------------------------------------------------------------------------
# Pallas matmul wrapper
# ---------------------------------------------------------------------------

def _deconv_matmul(x_flat, w_flat, b_flat, out_dtype):
    """(M, K) @ (K, N) + bias -> (M, N). N must be a multiple of 128."""
    M, K = x_flat.shape
    _, N = w_flat.shape
    in_itemsize = jnp.dtype(x_flat.dtype).itemsize
    out_itemsize = jnp.dtype(out_dtype).itemsize

    tn = _choose_tn(N, K, in_itemsize)
    tm = _choose_tm(M, K, tn, in_itemsize, out_itemsize)

    # Pad the pixel axis so the grid covers it exactly (no divisibility assert).
    M_pad = _round_up(M, tm)
    if M_pad != M:
        x_flat = jnp.pad(x_flat, ((0, M_pad - M), (0, 0)))

    grid = (M_pad // tm, N // tn)
    kernel = _deconv_vpu_kernel if K <= 8 else _deconv_mm_kernel

    vmem_need = _tile_vmem_bytes(tm, tn, K, in_itemsize, out_itemsize)
    vmem_limit = int(min(60 << 20, max(32 << 20, vmem_need + (4 << 20))))

    cost = pl.CostEstimate(
        flops=2 * M_pad * K * N,
        transcendentals=0,
        bytes_accessed=(M_pad * K + K * N + N) * in_itemsize + M_pad * N * out_itemsize,
    )

    def _build(single_buffer_consts):
        if single_buffer_consts:
            # weight / bias index_maps are constant: double-buffering them only
            # wastes VMEM, so request a single buffer.
            w_spec = pl.BlockSpec((K, tn), lambda i, j: (0, j),
                                  pipeline_mode=pl.Buffered(1))
            b_spec = pl.BlockSpec((1, tn), lambda i, j: (0, j),
                                  pipeline_mode=pl.Buffered(1))
        else:
            w_spec = pl.BlockSpec((K, tn), lambda i, j: (0, j))
            b_spec = pl.BlockSpec((1, tn), lambda i, j: (0, j))
        return pl.pallas_call(
            kernel,
            out_shape=jax.ShapeDtypeStruct((M_pad, N), out_dtype),
            grid_spec=pltpu.PrefetchScalarGridSpec(
                num_scalar_prefetch=0,
                grid=grid,
                in_specs=[
                    pl.BlockSpec((tm, K), lambda i, j: (i, 0)),
                    w_spec,
                    b_spec,
                ],
                out_specs=pl.BlockSpec((tm, tn), lambda i, j: (i, j)),
            ),
            compiler_params=pltpu.CompilerParams(
                dimension_semantics=("parallel", "parallel"),
                vmem_limit_bytes=vmem_limit,
            ),
            cost_estimate=cost,
        )

    try:
        out = _build(single_buffer_consts=True)(x_flat, w_flat, b_flat)
    except Exception:
        # jax versions without BlockSpec pipeline_mode / Buffered(1) support:
        # fall back to default (double) buffering — correctness identical.
        out = _build(single_buffer_consts=False)(x_flat, w_flat, b_flat)

    return out[:M] if M_pad != M else out


# ---------------------------------------------------------------------------
# Public forward passes
# ---------------------------------------------------------------------------

def _pack_weights(weight, bias, cout_pad, compute_dtype):
    Cin, Cout = weight.shape[0], weight.shape[1]
    # (Cin, Cout, kh, kw) -> (Cin, kh, kw, Cout) -> pad Cout -> (Cin, 4*Cout_pad)
    w = jnp.transpose(weight, (0, 2, 3, 1))
    if cout_pad != Cout:
        w = jnp.pad(w, ((0, 0), (0, 0), (0, 0), (0, cout_pad - Cout)))
    w_flat = w.reshape(Cin, 4 * cout_pad).astype(compute_dtype)
    b = bias if cout_pad == Cout else jnp.pad(bias, (0, cout_pad - Cout))
    b_flat = jnp.tile(b.astype(jnp.float32)[None, :], (1, 4))       # (1, 4*Cout_pad)
    return w_flat, b_flat


def upsampling_forward_nhwc(x_nhwc, weight, bias, *, compute_dtype=None, out_dtype=None):
    """ConvTranspose2d(k=2, s=2), NHWC in / NHWC out (no NCHW layout transposes)."""
    B, H, W, Cin = x_nhwc.shape
    Cout = weight.shape[1]
    cdtype = jnp.dtype(compute_dtype) if compute_dtype is not None else x_nhwc.dtype
    odtype = jnp.dtype(out_dtype) if out_dtype is not None else x_nhwc.dtype
    cout_pad = _round_up(Cout, 32)               # N = 4*cout_pad is a multiple of 128
    w_flat, b_flat = _pack_weights(weight, bias, cout_pad, cdtype)
    x_flat = x_nhwc.reshape(B * H * W, Cin).astype(cdtype)
    out_flat = _deconv_matmul(x_flat, w_flat, b_flat, odtype)        # (M, 4*cout_pad)
    out = out_flat.reshape(B, H, W, 2, 2, cout_pad)
    out = jnp.transpose(out, (0, 1, 3, 2, 4, 5)).reshape(B, 2 * H, 2 * W, cout_pad)
    return out[..., :Cout]


def upsampling_forward(x_nchw, weight, bias, *, compute_dtype=None, out_dtype=None):
    """ConvTranspose2d(k=2, s=2), PyTorch NCHW in / NCHW out.

    x_nchw: (B, Cin, H, W); weight: (Cin, Cout, 2, 2); bias: (Cout,)
    returns (B, Cout, 2H, 2W)
    """
    B, Cin, H, W = x_nchw.shape
    Cout = weight.shape[1]
    cdtype = jnp.dtype(compute_dtype) if compute_dtype is not None else x_nchw.dtype
    odtype = jnp.dtype(out_dtype) if out_dtype is not None else x_nchw.dtype
    cout_pad = _round_up(Cout, 32)
    w_flat, b_flat = _pack_weights(weight, bias, cout_pad, cdtype)
    # one input layout transpose: NCHW -> (B*H*W, Cin)
    x_flat = jnp.transpose(x_nchw, (0, 2, 3, 1)).reshape(B * H * W, Cin).astype(cdtype)
    out_flat = _deconv_matmul(x_flat, w_flat, b_flat, odtype)
    # one output layout transpose: (B,H,W,kh,kw,Cout) -> (B,Cout,2H,2W)
    out = out_flat.reshape(B, H, W, 2, 2, cout_pad)[..., :Cout]
    out = jnp.transpose(out, (0, 5, 1, 3, 2, 4)).reshape(B, Cout, 2 * H, 2 * W)
    return out


# ---------------------------------------------------------------------------
# Pure-JAX reference + self-test
# ---------------------------------------------------------------------------

def _reference_forward(x_nchw, weight, bias):
    B, Cin, H, W = x_nchw.shape
    Cout = weight.shape[1]
    # out[b, co, 2h+kh, 2w+kw] = sum_ci x[b,ci,h,w] * W[ci,co,kh,kw] + bias[co]
    y = jnp.einsum("bchw,cokl->bohkwl", x_nchw, weight)     # (B, Cout, H, kh, W, kw)
    return y.reshape(B, Cout, 2 * H, 2 * W) + bias[None, :, None, None]


if __name__ == "__main__":
    key = jax.random.PRNGKey(0)
    B, Cin, Cout, H, W = 2, 4, 8, 16, 16

    k_x, k_w, k_b = jax.random.split(key, 3)
    x = jax.random.normal(k_x, (B, Cin, H, W), dtype=jnp.float32)

    # PyTorch ConvTranspose2d default init bound: U(-1/sqrt(Cin*kH*kW), +...)
    fan_in = Cin * 2 * 2
    bound = 1.0 / float(fan_in ** 0.5)
    weight = jax.random.uniform(k_w, (Cin, Cout, 2, 2), jnp.float32, -bound, bound)
    bias = jax.random.uniform(k_b, (Cout,), jnp.float32, -bound, bound)

    out = jax.block_until_ready(upsampling_forward(x, weight, bias))
    ref = _reference_forward(x, weight, bias)
    assert out.shape == (B, Cout, 2 * H, 2 * W), out.shape
    assert jnp.allclose(out, ref, atol=1e-5, rtol=1e-5), "NCHW path mismatch vs reference"

    # NHWC fast path (no layout transposes around the kernel) must agree too.
    out_nhwc = jax.block_until_ready(
        upsampling_forward_nhwc(jnp.transpose(x, (0, 2, 3, 1)), weight, bias))
    assert jnp.allclose(jnp.transpose(out_nhwc, (0, 3, 1, 2)), ref,
                        atol=1e-5, rtol=1e-5), "NHWC path mismatch vs reference"

    print("KERNEL_OK")
</pallas_src>

<mosaic_0001>
module attributes {stable_mosaic.version = 11 : i64} {
  func.func @_deconv_vpu_kernel(%arg0: i32, %arg1: i32, %arg2: memref<256x4xf32, #tpu.memory_space<vmem>>, %arg3: memref<4x128xf32, #tpu.memory_space<vmem>>, %arg4: memref<1x128xf32, #tpu.memory_space<vmem>>, %arg5: memref<256x128xf32, #tpu.memory_space<vmem>>) attributes {dimension_semantics = [#tpu.dimension_semantics<parallel>, #tpu.dimension_semantics<parallel>], iteration_bounds = array<i64: 2, 1>, scalar_prefetch = 0 : i64, scratch_operands = 0 : i64, tpu.core_type = #tpu.core_type<tc>, window_params = [{transform_indices = @transform_0, window_bounds = array<i64: 256, 4>}, {pipeline_mode = #tpu.pipeline_mode<synchronous>, transform_indices = @transform_1, window_bounds = array<i64: 4, 128>}, {pipeline_mode = #tpu.pipeline_mode<synchronous>, transform_indices = @transform_2, window_bounds = array<i64: 1, 128>}, {transform_indices = @transform_3, window_bounds = array<i64: 256, 128>}]} {
    %c0 = arith.constant 0 : index
    %c0_0 = arith.constant 0 : index
    %0 = vector.load %arg2[%c0, %c0_0] : memref<256x4xf32, #tpu.memory_space<vmem>>, vector<256x4xf32>
    %c0_1 = arith.constant 0 : index
    %c0_2 = arith.constant 0 : index
    %1 = vector.load %arg3[%c0_1, %c0_2] : memref<4x128xf32, #tpu.memory_space<vmem>>, vector<4x128xf32>
    %c0_3 = arith.constant 0 : index
    %c0_4 = arith.constant 0 : index
    %2 = vector.load %arg4[%c0_3, %c0_4] : memref<1x128xf32, #tpu.memory_space<vmem>>, vector<1x128xf32>
    %3 = vector.shape_cast %2 : vector<1x128xf32> to vector<1x128xf32>
    %4 = vector.broadcast %3 : vector<1x128xf32> to vector<256x128xf32>
    %5 = vector.extract_strided_slice %0 {offsets = [0, 0], sizes = [256, 1], strides = [1, 1]} : vector<256x4xf32> to vector<256x1xf32>
    %6 = vector.extract_strided_slice %1 {offsets = [0, 0], sizes = [1, 128], strides = [1, 1]} : vector<4x128xf32> to vector<1x128xf32>
    %7 = vector.broadcast %5 : vector<256x1xf32> to vector<256x128xf32>
    %8 = vector.broadcast %6 : vector<1x128xf32> to vector<256x128xf32>
    %9 = arith.mulf %7, %8 : vector<256x128xf32>
    %10 = arith.addf %4, %9 : vector<256x128xf32>
    %11 = vector.extract_strided_slice %0 {offsets = [0, 1], sizes = [256, 1], strides = [1, 1]} : vector<256x4xf32> to vector<256x1xf32>
    %12 = vector.extract_strided_slice %1 {offsets = [1, 0], sizes = [1, 128], strides = [1, 1]} : vector<4x128xf32> to vector<1x128xf32>
    %13 = vector.broadcast %11 : vector<256x1xf32> to vector<256x128xf32>
    %14 = vector.broadcast %12 : vector<1x128xf32> to vector<256x128xf32>
    %15 = arith.mulf %13, %14 : vector<256x128xf32>
    %16 = arith.addf %10, %15 : vector<256x128xf32>
    %17 = vector.extract_strided_slice %0 {offsets = [0, 2], sizes = [256, 1], strides = [1, 1]} : vector<256x4xf32> to vector<256x1xf32>
    %18 = vector.extract_strided_slice %1 {offsets = [2, 0], sizes = [1, 128], strides = [1, 1]} : vector<4x128xf32> to vector<1x128xf32>
    %19 = vector.broadcast %17 : vector<256x1xf32> to vector<256x128xf32>
    %20 = vector.broadcast %18 : vector<1x128xf32> to vector<256x128xf32>
    %21 = arith.mulf %19, %20 : vector<256x128xf32>
    %22 = arith.addf %16, %21 : vector<256x128xf32>
    %23 = vector.extract_strided_slice %0 {offsets = [0, 3], sizes = [256, 1], strides = [1, 1]} : vector<256x4xf32> to vector<256x1xf32>
    %24 = vector.extract_strided_slice %1 {offsets = [3, 0], sizes = [1, 128], strides = [1, 1]} : vector<4x128xf32> to vector<1x128xf32>
    %25 = vector.broadcast %23 : vector<256x1xf32> to vector<256x128xf32>
    %26 = vector.broadcast %24 : vector<1x128xf32> to vector<256x128xf32>
    %27 = arith.mulf %25, %26 : vector<256x128xf32>
    %28 = arith.addf %22, %27 : vector<256x128xf32>
    %c0_5 = arith.constant 0 : index
    %c0_6 = arith.constant 0 : index
    %29 = vector.load %arg5[%c0_5, %c0_6] : memref<256x128xf32, #tpu.memory_space<vmem>>, vector<256x128xf32>
    tpu.vector_store %arg5[%c0_5, %c0_6], %28 {strides = array<i32>} : memref<256x128xf32, #tpu.memory_space<vmem>>, vector<256x128xf32>,
    return
  }
  func.func @transform_0(%arg0: i32, %arg1: i32) -> (i32, i32) {
    %c0_i32 = arith.constant 0 : i32
    %c0_i32_0 = arith.constant 0 : i32
    return %arg0, %c0_i32 : i32, i32
  }
  func.func @transform_1(%arg0: i32, %arg1: i32) -> (i32, i32) {
    %c0_i32 = arith.constant 0 : i32
    %c0_i32_0 = arith.constant 0 : i32
    return %c0_i32, %arg1 : i32, i32
  }
  func.func @transform_2(%arg0: i32, %arg1: i32) -> (i32, i32) {
    %c0_i32 = arith.constant 0 : i32
    %c0_i32_0 = arith.constant 0 : i32
    return %c0_i32, %arg1 : i32, i32
  }
  func.func @transform_3(%arg0: i32, %arg1: i32) -> (i32, i32) {
    %c0_i32 = arith.constant 0 : i32
    return %arg0, %arg1 : i32, i32
  }
}

module attributes {stable_mosaic.version = 11 : i64} {
  func.func @_deconv_vpu_kernel(%arg0: i32, %arg1: i32, %arg2: memref<256x4xf32, #tpu.memory_space<vmem>>, %arg3: memref<4x128xf32, #tpu.memory_space<vmem>>, %arg4: memref<1x128xf32, #tpu.memory_space<vmem>>, %arg5: memref<256x128xf32, #tpu.memory_space<vmem>>) attributes {dimension_semantics = [#tpu.dimension_semantics<parallel>, #tpu.dimension_semantics<parallel>], iteration_bounds = array<i64: 2, 1>, scalar_prefetch = 0 : i64, scratch_operands = 0 : i64, tpu.core_type = #tpu.core_type<tc>, window_params = [{transform_indices = @transform_0, window_bounds = array<i64: 256, 4>}, {transform_indices = @transform_1, window_bounds = array<i64: 4, 128>}, {transform_indices = @transform_2, window_bounds = array<i64: 1, 128>}, {transform_indices = @transform_3, window_bounds = array<i64: 256, 128>}]} {
    %c0 = arith.constant 0 : index
    %c0_0 = arith.constant 0 : index
    %0 = vector.load %arg2[%c0, %c0_0] : memref<256x4xf32, #tpu.memory_space<vmem>>, vector<256x4xf32>
    %c0_1 = arith.constant 0 : index
    %c0_2 = arith.constant 0 : index
    %1 = vector.load %arg3[%c0_1, %c0_2] : memref<4x128xf32, #tpu.memory_space<vmem>>, vector<4x128xf32>
    %c0_3 = arith.constant 0 : index
    %c0_4 = arith.constant 0 : index
    %2 = vector.load %arg4[%c0_3, %c0_4] : memref<1x128xf32, #tpu.memory_space<vmem>>, vector<1x128xf32>
    %3 = vector.shape_cast %2 : vector<1x128xf32> to vector<1x128xf32>
    %4 = vector.broadcast %3 : vector<1x128xf32> to vector<256x128xf32>
    %5 = vector.extract_strided_slice %0 {offsets = [0, 0], sizes = [256, 1], strides = [1, 1]} : vector<256x4xf32> to vector<256x1xf32>
    %6 = vector.extract_strided_slice %1 {offsets = [0, 0], sizes = [1, 128], strides = [1, 1]} : vector<4x128xf32> to vector<1x128xf32>
    %7 = vector.broadcast %5 : vector<256x1xf32> to vector<256x128xf32>
    %8 = vector.broadcast %6 : vector<1x128xf32> to vector<256x128xf32>
    %9 = arith.mulf %7, %8 : vector<256x128xf32>
    %10 = arith.addf %4, %9 : vector<256x128xf32>
    %11 = vector.extract_strided_slice %0 {offsets = [0, 1], sizes = [256, 1], strides = [1, 1]} : vector<256x4xf32> to vector<256x1xf32>
    %12 = vector.extract_strided_slice %1 {offsets = [1, 0], sizes = [1, 128], strides = [1, 1]} : vector<4x128xf32> to vector<1x128xf32>
    %13 = vector.broadcast %11 : vector<256x1xf32> to vector<256x128xf32>
    %14 = vector.broadcast %12 : vector<1x128xf32> to vector<256x128xf32>
    %15 = arith.mulf %13, %14 : vector<256x128xf32>
    %16 = arith.addf %10, %15 : vector<256x128xf32>
    %17 = vector.extract_strided_slice %0 {offsets = [0, 2], sizes = [256, 1], strides = [1, 1]} : vector<256x4xf32> to vector<256x1xf32>
    %18 = vector.extract_strided_slice %1 {offsets = [2, 0], sizes = [1, 128], strides = [1, 1]} : vector<4x128xf32> to vector<1x128xf32>
    %19 = vector.broadcast %17 : vector<256x1xf32> to vector<256x128xf32>
    %20 = vector.broadcast %18 : vector<1x128xf32> to vector<256x128xf32>
    %21 = arith.mulf %19, %20 : vector<256x128xf32>
    %22 = arith.addf %16, %21 : vector<256x128xf32>
    %23 = vector.extract_strided_slice %0 {offsets = [0, 3], sizes = [256, 1], strides = [1, 1]} : vector<256x4xf32> to vector<256x1xf32>
    %24 = vector.extract_strided_slice %1 {offsets = [3, 0], sizes = [1, 128], strides = [1, 1]} : vector<4x128xf32> to vector<1x128xf32>
    %25 = vector.broadcast %23 : vector<256x1xf32> to vector<256x128xf32>
    %26 = vector.broadcast %24 : vector<1x128xf32> to vector<256x128xf32>
    %27 = arith.mulf %25, %26 : vector<256x128xf32>
    %28 = arith.addf %22, %27 : vector<256x128xf32>
    %c0_5 = arith.constant 0 : index
    %c0_6 = arith.constant 0 : index
    %29 = vector.load %arg5[%c0_5, %c0_6] : memref<256x128xf32, #tpu.memory_space<vmem>>, vector<256x128xf32>
    tpu.vector_store %arg5[%c0_5, %c0_6], %28 {strides = array<i32>} : memref<256x128xf32, #tpu.memory_space<vmem>>, vector<256x128xf32>,
    return
  }
  func.func @transform_0(%arg0: i32, %arg1: i32) -> (i32, i32) {
    %c0_i32 = arith.constant 0 : i32
    %c0_i32_0 = arith.constant 0 : i32
    return %arg0, %c0_i32 : i32, i32
  }
  func.func @transform_1(%arg0: i32, %arg1: i32) -> (i32, i32) {
    %c0_i32 = arith.constant 0 : i32
    %c0_i32_0 = arith.constant 0 : i32
    return %c0_i32, %arg1 : i32, i32
  }
  func.func @transform_2(%arg0: i32, %arg1: i32) -> (i32, i32) {
    %c0_i32 = arith.constant 0 : i32
    %c0_i32_0 = arith.constant 0 : i32
    return %c0_i32, %arg1 : i32, i32
  }
  func.func @transform_3(%arg0: i32, %arg1: i32) -> (i32, i32) {
    %c0_i32 = arith.constant 0 : i32
    return %arg0, %arg1 : i32, i32
  }
}

</mosaic_0001>

<llo_original>
// kernel: tpu_custom_call.1
$region0: #{tpu_custom_call.1}
  #allocation0 [shape = 'u32[]', space=smem, size = 0x4, offset = 0x4, fixed_abs, tag = 'smem constant byte address 0x4 - core index']
  #allocation1 [shape = 'u32[144,128]{1,0:T(1,128)}', space=vmem, size = 0x12000, scoped, tag = 'internal scratch']
  %s0 = inlined_call_operand.vmem [shape: f32[512,4], index: 0, kind: input, shape index: {}]
  %s1 = inlined_call_operand.vmem [shape: f32[4,128], index: 1, kind: input, shape index: {}]
  %s2 = inlined_call_operand.vmem [shape: f32[1,128], index: 2, kind: input, shape index: {}]
  %s3 = inlined_call_operand.hbm [shape: f32[512,128], index: 3, kind: output, shape index: {}]
  %s4 = sld [smem:[#allocation0]]
  $region45: #{tpu_custom_call.1} parent=0
    _
  %s6 = ssub.s32 1, %s4
  %s7 = scalar_select 0, %s6, %s4
  $region1: #{tpu_custom_call.1} parent=0
    #allocation2 [shape = 'u8[262144]{0}', space=vmem, size = 0x40000, scoped, tag = 'output window, operand 0']
    #allocation3 [shape = 's32[2]{0}', space=sflag, size = 0x8, scoped, tag = 'scoped memory for tpu_custom_call.1']
    %8 = vsyncpa [#allocation3], 0
    %s9 = scalar_lea.sflag [#allocation3], 1
    %10 = vsyncpa %s9, 0
    loop: start=0, step=1, limit=4
    $region2: #{tpu_custom_call.1} parent=1 // loop_pre_header
      _
    $region3: #{tpu_custom_call.1} parent=1 // loop_header
      %s12 = sphi 0, %s16
      %p13 = scmp.ge.s32.totalorder %s12, 4
      %s19 = sphi 0, %s31
      %s20 = sphi 0, %s27
      %s21 = sphi 0, %s19
      %s22 = sphi 0, %s20
      %s23 = sphi 0, %s21
      %s24 = sphi 0, %s22
      %s34 = sphi 0, %s36
      %s37 = sphi 0, %s34
      %s38 = sphi 0, %s37
      %s54 = sphi 0, %s38
      %s60 = sphi 0, %s62
      %s63 = sphi 0, %s60
      %s64 = sphi 0, %s63
      %s80 = sphi 0, %s64
      %s86 = sphi 0, %s88
      %s89 = sphi 0, %s86
      %s90 = sphi 0, %s89
      %s106 = sphi 0, %s90
      %s114 = sphi 0, %s116
      %s117 = sphi 0, %s114
      %s118 = sphi 0, %s117
      %s134 = sphi 0, %s118
    $region4: #{tpu_custom_call.1} parent=1 // loop_header_branch
      %15 = sbr.rel (%p13) target = $region8
    $region5: #{tpu_custom_call.1} parent=1 // loop_body
      %s17 = ssub.s32 %s12, 1
      %s18 = ssub.s32 %s12, 2
      %s25 = sadd.s32 1, %s20
      %p26 = scmp.ge.s32.totalorder %s25, 1
      %s27 = scalar_select %p26, 0, %s25
      %s28 = sadd.s32 1, %s19
      %s29 = scalar_select %p26, %s28, %s19
      %p30 = scmp.ge.s32.totalorder %s29, 2
      %s31 = scalar_select %p30, 0, %s29
      %s32 = ssub.s32 %s19, %s31
      %p33 = scmp.eq.s32.totalorder %s32, 0
      %s35 = sadd.s32 %s34, 1
      %s36 = scalar_select %p33, %s34, %s35
      %p39 = pneg %p33
      %p40 = scmp.eq.s32.totalorder %s12, 1
      %p41 = por %p39, %p40
      %p42 = scmp.ne.s32.totalorder %s34, %s37
      %p43 = scmp.eq.s32.totalorder %s12, 0
      %p44 = por %p42, %p43
      %p45 = scmp.ne.s32.totalorder %s34, %s37
      %p46 = scmp.eq.s32.totalorder %s17, 1
      %p47 = por %p45, %p46
      %p48 = scmp.ne.s32.totalorder %s37, %s38
      %p49 = scmp.eq.s32.totalorder %s17, 0
      %p50 = por %p48, %p49
      %p51 = scmp.ne.s32.totalorder %s37, %s38
      %p52 = scmp.eq.s32.totalorder %s18, 1
      %p53 = por %p51, %p52
      %p55 = scmp.ne.s32.totalorder %s38, %s54
      %p56 = scmp.eq.s32.totalorder %s18, 0
      %p57 = por %p55, %p56
      %s58 = ssub.s32 %s20, %s27
      %p59 = scmp.eq.s32.totalorder %s58, 0
      %s61 = sadd.s32 %s60, 1
      %s62 = scalar_select %p59, %s60, %s61
      %p65 = pneg %p59
      %p66 = scmp.eq.s32.totalorder %s12, 1
      %p67 = por %p65, %p66
      %p68 = scmp.ne.s32.totalorder %s60, %s63
      %p69 = scmp.eq.s32.totalorder %s12, 0
      %p70 = por %p68, %p69
      %p71 = scmp.ne.s32.totalorder %s60, %s63
      %p72 = scmp.eq.s32.totalorder %s17, 1
      %p73 = por %p71, %p72
      %p74 = scmp.ne.s32.totalorder %s63, %s64
      %p75 = scmp.eq.s32.totalorder %s17, 0
      %p76 = por %p74, %p75
      %p77 = scmp.ne.s32.totalorder %s63, %s64
      %p78 = scmp.eq.s32.totalorder %s18, 1
      %p79 = por %p77, %p78
      %p81 = scmp.ne.s32.totalorder %s64, %s80
      %p82 = scmp.eq.s32.totalorder %s18, 0
      %p83 = por %p81, %p82
      %s84 = ssub.s32 %s20, %s27
      %p85 = scmp.eq.s32.totalorder %s84, 0
      %s87 = sadd.s32 %s86, 1
      %s88 = scalar_select %p85, %s86, %s87
      %p91 = pneg %p85
      %p92 = scmp.eq.s32.totalorder %s12, 1
      %p93 = por %p91, %p92
      %p94 = scmp.ne.s32.totalorder %s86, %s89
      %p95 = scmp.eq.s32.totalorder %s12, 0
      %p96 = por %p94, %p95
      %p97 = scmp.ne.s32.totalorder %s86, %s89
      %p98 = scmp.eq.s32.totalorder %s17, 1
      %p99 = por %p97, %p98
      %p100 = scmp.ne.s32.totalorder %s89, %s90
      %p101 = scmp.eq.s32.totalorder %s17, 0
      %p102 = por %p100, %p101
      %p103 = scmp.ne.s32.totalorder %s89, %s90
      %p104 = scmp.eq.s32.totalorder %s18, 1
      %p105 = por %p103, %p104
      %p107 = scmp.ne.s32.totalorder %s90, %s106
      %p108 = scmp.eq.s32.totalorder %s18, 0
      %p109 = por %p107, %p108
      %s110 = ssub.s32 %s19, %s31
      %s111 = ssub.s32 %s20, %s27
      %s112 = sor.u32 %s110, %s111
      %p113 = scmp.eq.s32.totalorder %s112, 0
      %s115 = sadd.s32 %s114, 1
      %s116 = scalar_select %p113, %s114, %s115
      %p119 = pneg %p113
      %p120 = scmp.eq.s32.totalorder %s12, 1
      %p121 = por %p119, %p120
      %p122 = scmp.ne.s32.totalorder %s114, %s117
      %p123 = scmp.eq.s32.totalorder %s12, 0
      %p124 = por %p122, %p123
      %p125 = scmp.ne.s32.totalorder %s114, %s117
      %p126 = scmp.eq.s32.totalorder %s17, 1
      %p127 = por %p125, %p126
      %p128 = scmp.ne.s32.totalorder %s117, %s118
      %p129 = scmp.eq.s32.totalorder %s17, 0
      %p130 = por %p128, %p129
      %p131 = scmp.ne.s32.totalorder %s117, %s118
      %p132 = scmp.eq.s32.totalorder %s18, 1
      %p133 = por %p131, %p132
      %p135 = scmp.ne.s32.totalorder %s118, %s134
      %p136 = scmp.eq.s32.totalorder %s18, 0
      %p137 = por %p135, %p136
      %p138 = scmp.le.s32.totalorder 1, %s12
      %p139 = scmp.lt.s32.totalorder %s12, 3
      %p140 = pnand %p138, %p139
      %p141 = pneg %p140
      // Predicated region
      $region9: #{tpu_custom_call.1} parent=5 // pred_check
        _
      $region10: #{tpu_custom_call.1} parent=5 // pred_check_branch
        %143 = sbr.rel (%p140) target = $region12
      $region11: #{tpu_custom_call.1} parent=5 // pred_region
        %s144 = ssub.s32 %s12, 1
        // Predicated region
        $region13: #{tpu_custom_call.1} parent=11 // pred_check
          %p145 = pneg %p76
        $region14: #{tpu_custom_call.1} parent=11 // pred_check_branch
          %147 = sbr.rel (%p145) target = $region16
        $region15: #{tpu_custom_call.1} parent=11 // pred_region
          %p148 = scmp.lt.s32.totalorder %s22, 0
          %s149 = scalar_select %p148, %s22, 0
          %s150 = smul.addr %s149, 4
          %s151 = scalar_lea.vmem %s1, %s150
        $region16: #{tpu_custom_call.1} parent=11 // pred_fallthru
          _
        // Predicated region
        $region17: #{tpu_custom_call.1} parent=11 // pred_check
          %p152 = pneg %p102
        $region18: #{tpu_custom_call.1} parent=11 // pred_check_branch
          %154 = sbr.rel (%p152) target = $region20
        $region19: #{tpu_custom_call.1} parent=11 // pred_region
          %p155 = scmp.lt.s32.totalorder %s22, 0
          %s156 = scalar_select %p155, %s22, 0
          %s157 = scalar_lea.vmem %s2, %s156
        $region20: #{tpu_custom_call.1} parent=11 // pred_fallthru
          _
      $region12: #{tpu_custom_call.1} parent=5 // pred_fallthru
        _
      %p158 = scmp.lt.s32.totalorder %s12, 2
      // Predicated region
      $region21: #{tpu_custom_call.1} parent=5 // pred_check
        %p159 = pneg %p158
      $region22: #{tpu_custom_call.1} parent=5 // pred_check_branch
        %161 = sbr.rel (%p159) target = $region24
      $region23: #{tpu_custom_call.1} parent=5 // pred_region
        // Predicated region
        $region25: #{tpu_custom_call.1} parent=23 // pred_check
          %p162 = pneg %p44
        $region26: #{tpu_custom_call.1} parent=23 // pred_check_branch
          %164 = sbr.rel (%p162) target = $region28
        $region27: #{tpu_custom_call.1} parent=23 // pred_region
          %s165 = smul.u32 32, %s19
          %p166 = scmp.lt.s32.totalorder %s165, 63
          %s167 = scalar_select %p166, %s165, 63
          %s168 = smul.addr %s167, 8
          %s169 = scalar_lea.vmem %s0, %s168
          %s170 = smul.u32 32, %s19
        $region28: #{tpu_custom_call.1} parent=23 // pred_fallthru
          _
      $region24: #{tpu_custom_call.1} parent=5 // pred_fallthru
        _
      %p171 = scmp.le.s32.totalorder 1, %s12
      %p172 = scmp.lt.s32.totalorder %s12, 3
      %p173 = pnand %p171, %p172
      %p174 = pneg %p173
      // Predicated region
      $region29: #{tpu_custom_call.1} parent=5 // pred_check
        _
      $region30: #{tpu_custom_call.1} parent=5 // pred_check_branch
        %176 = sbr.rel (%p173) target = $region32
      $region31: #{tpu_custom_call.1} parent=5 // pred_region
        %s177 = ssub.s32 %s12, 1
        %s178 = smul.u32 32, %s21
        %p179 = scmp.lt.s32.totalorder %s178, 63
        %s180 = scalar_select %p179, %s178, 63
        %s181 = smul.addr %s180, 8
        %s182 = scalar_lea.vmem %s0, %s181
        %p183 = pneg %p50
        %p184 = pneg %p47
        %p185 = scmp.lt.s32.totalorder %s22, 0
        %s186 = scalar_select %p185, %s22, 0
        %s187 = smul.addr %s186, 4
        %s188 = scalar_lea.vmem %s1, %s187
        %p189 = pneg %p76
        %p190 = pneg %p73
        %p191 = scmp.lt.s32.totalorder %s22, 0
        %s192 = scalar_select %p191, %s22, 0
        %s193 = scalar_lea.vmem %s2, %s192
        %p194 = pneg %p102
        %p195 = pneg %p99
        %p196 = pneg %p130
        %p197 = pneg %p127
        %s198 = sand.u32 %s117, 1
        %s199 = scalar_lea.sflag [#allocation3], %s198
        %s200 = sand.u32 %s117, 1
        %s201 = smul.addr %s200, 256
        %s202 = scalar_lea.vmem [#allocation2], %s201
        %s203 = smul.u32 32, %s21
        %p204 = scmp.lt.s32.totalorder %s203, 63
        %s205 = scalar_select %p204, %s203, 63
        %s206 = smul.addr %s205, 8
        %s207 = scalar_lea.vmem %s0, %s206
        %s208 = smul.u32 32, %s21
        %p209 = scmp.lt.s32.totalorder %s22, 0
        %s210 = scalar_select %p209, %s22, 0
        %s211 = smul.addr %s210, 4
        %s212 = scalar_lea.vmem %s1, %s211
        %p213 = scmp.lt.s32.totalorder %s22, 0
        %s214 = scalar_select %p213, %s22, 0
        %s215 = scalar_lea.vmem %s2, %s214
        %s216 = smul.u32 32, %s21
        %v217 = vld [vmem:[%s207] sm:$0xff]
        %v218 = vld [vmem:[%s207 + $0x8] sm:$0xff]
        %v219 = vld [vmem:[%s207 + $0x10] sm:$0xff]
        %v220 = vld [vmem:[%s207 + $0x18] sm:$0xff]
        %v221 = vld [vmem:[%s207 + $0x20] sm:$0xff]
        %v222 = vld [vmem:[%s207 + $0x28] sm:$0xff]
        %v223 = vld [vmem:[%s207 + $0x30] sm:$0xff]
        %v224 = vld [vmem:[%s207 + $0x38] sm:$0xff]
        %v225 = vld [vmem:[%s207 + $0x40] sm:$0xff]
        %v226 = vld [vmem:[%s207 + $0x48] sm:$0xff]
        %v227 = vld [vmem:[%s207 + $0x50] sm:$0xff]
        %v228 = vld [vmem:[%s207 + $0x58] sm:$0xff]
        %v229 = vld [vmem:[%s207 + $0x60] sm:$0xff]
        %v230 = vld [vmem:[%s207 + $0x68] sm:$0xff]
        %v231 = vld [vmem:[%s207 + $0x70] sm:$0xff]
        %v232 = vld [vmem:[%s207 + $0x78] sm:$0xff]
        %v233 = vld [vmem:[%s207 + $0x80] sm:$0xff]
        %v234 = vld [vmem:[%s207 + $0x88] sm:$0xff]
        %v235 = vld [vmem:[%s207 + $0x90] sm:$0xff]
        %v236 = vld [vmem:[%s207 + $0x98] sm:$0xff]
        %v237 = vld [vmem:[%s207 + $0xa0] sm:$0xff]
        %v238 = vld [vmem:[%s207 + $0xa8] sm:$0xff]
        %v239 = vld [vmem:[%s207 + $0xb0] sm:$0xff]
        %v240 = vld [vmem:[%s207 + $0xb8] sm:$0xff]
        %v241 = vld [vmem:[%s207 + $0xc0] sm:$0xff]
        %v242 = vld [vmem:[%s207 + $0xc8] sm:$0xff]
        %v243 = vld [vmem:[%s207 + $0xd0] sm:$0xff]
        %v244 = vld [vmem:[%s207 + $0xd8] sm:$0xff]
        %v245 = vld [vmem:[%s207 + $0xe0] sm:$0xff]
        %v246 = vld [vmem:[%s207 + $0xe8] sm:$0xff]
        %v247 = vld [vmem:[%s207 + $0xf0] sm:$0xff]
        %v248 = vld [vmem:[%s207 + $0xf8] sm:$0xff]
        %v249 = vld [vmem:[%s212] sm:$0xf]
        %v250 = vld [vmem:[%s215] sm:$0x1]
        %v252 = vlaneseq
        %v253 = vshrl.u32 %v252, 7
        %v254 = vsub.s32 0, %v253
        %v255 = vrot.slane %v250, %v254
        %258 = vset.pattern.permute.xlu0 0
        %259 = vperm.xlu0 %258, %v217
        %v260 = vpop.permute.xlu0 %259
        %263 = vset.pattern.permute.xlu0 0
        %264 = vperm.xlu0 %263, %v218
        %v265 = vpop.permute.xlu0 %264
        %268 = vset.pattern.permute.xlu0 0
        %269 = vperm.xlu0 %268, %v219
        %v270 = vpop.permute.xlu0 %269
        %273 = vset.pattern.permute.xlu0 0
        %274 = vperm.xlu0 %273, %v220
        %v275 = vpop.permute.xlu0 %274
        %278 = vset.pattern.permute.xlu0 0
        %279 = vperm.xlu0 %278, %v221
        %v280 = vpop.permute.xlu0 %279
        %283 = vset.pattern.permute.xlu0 0
        %284 = vperm.xlu0 %283, %v222
        %v285 = vpop.permute.xlu0 %284
        %288 = vset.pattern.permute.xlu0 0
        %289 = vperm.xlu0 %288, %v223
        %v290 = vpop.permute.xlu0 %289
        %293 = vset.pattern.permute.xlu0 0
        %294 = vperm.xlu0 %293, %v224
        %v295 = vpop.permute.xlu0 %294
        %298 = vset.pattern.permute.xlu0 0
        %299 = vperm.xlu0 %298, %v225
        %v300 = vpop.permute.xlu0 %299
        %303 = vset.pattern.permute.xlu0 0
        %304 = vperm.xlu0 %303, %v226
        %v305 = vpop.permute.xlu0 %304
        %308 = vset.pattern.permute.xlu0 0
        %309 = vperm.xlu0 %308, %v227
        %v310 = vpop.permute.xlu0 %309
        %313 = vset.pattern.permute.xlu0 0
        %314 = vperm.xlu0 %313, %v228
        %v315 = vpop.permute.xlu0 %314
        %318 = vset.pattern.permute.xlu0 0
        %319 = vperm.xlu0 %318, %v229
        %v320 = vpop.permute.xlu0 %319
        %323 = vset.pattern.permute.xlu0 0
        %324 = vperm.xlu0 %323, %v230
        %v325 = vpop.permute.xlu0 %324
        %328 = vset.pattern.permute.xlu0 0
        %329 = vperm.xlu0 %328, %v231
        %v330 = vpop.permute.xlu0 %329
        %333 = vset.pattern.permute.xlu0 0
        %334 = vperm.xlu0 %333, %v232
        %v335 = vpop.permute.xlu0 %334
        %338 = vset.pattern.permute.xlu0 0
        %339 = vperm.xlu0 %338, %v233
        %v340 = vpop.permute.xlu0 %339
        %343 = vset.pattern.permute.xlu0 0
        %344 = vperm.xlu0 %343, %v234
        %v345 = vpop.permute.xlu0 %344
        %348 = vset.pattern.permute.xlu0 0
        %349 = vperm.xlu0 %348, %v235
        %v350 = vpop.permute.xlu0 %349
        %353 = vset.pattern.permute.xlu0 0
        %354 = vperm.xlu0 %353, %v236
        %v355 = vpop.permute.xlu0 %354
        %358 = vset.pattern.permute.xlu0 0
        %359 = vperm.xlu0 %358, %v237
        %v360 = vpop.permute.xlu0 %359
        %363 = vset.pattern.permute.xlu0 0
        %364 = vperm.xlu0 %363, %v238
        %v365 = vpop.permute.xlu0 %364
        %368 = vset.pattern.permute.xlu0 0
        %369 = vperm.xlu0 %368, %v239
        %v370 = vpop.permute.xlu0 %369
        %373 = vset.pattern.permute.xlu0 0
        %374 = vperm.xlu0 %373, %v240
        %v375 = vpop.permute.xlu0 %374
        %378 = vset.pattern.permute.xlu0 0
        %379 = vperm.xlu0 %378, %v241
        %v380 = vpop.permute.xlu0 %379
        %383 = vset.pattern.permute.xlu0 0
        %384 = vperm.xlu0 %383, %v242
        %v385 = vpop.permute.xlu0 %384
        %388 = vset.pattern.permute.xlu0 0
        %389 = vperm.xlu0 %388, %v243
        %v390 = vpop.permute.xlu0 %389
        %393 = vset.pattern.permute.xlu0 0
        %394 = vperm.xlu0 %393, %v244
        %v395 = vpop.permute.xlu0 %394
        %398 = vset.pattern.permute.xlu0 0
        %399 = vperm.xlu0 %398, %v245
        %v400 = vpop.permute.xlu0 %399
        %403 = vset.pattern.permute.xlu0 0
        %404 = vperm.xlu0 %403, %v246
        %v405 = vpop.permute.xlu0 %404
        %408 = vset.pattern.permute.xlu0 0
        %409 = vperm.xlu0 %408, %v247
        %v410 = vpop.permute.xlu0 %409
        %413 = vset.pattern.permute.xlu0 0
        %414 = vperm.xlu0 %413, %v248
        %v415 = vpop.permute.xlu0 %414
        %v417 = vlaneseq
        %v418 = vshrl.u32 %v417, 7
        %v419 = vsub.s32 0, %v418
        %v420 = vrot.slane %v249, %v419
        %v421 = vmul.f32 %v260, %v420
        %v422 = vmul.f32 %v265, %v420
        %v423 = vmul.f32 %v270, %v420
        %v424 = vmul.f32 %v275, %v420
        %v425 = vmul.f32 %v280, %v420
        %v426 = vmul.f32 %v285, %v420
        %v427 = vmul.f32 %v290, %v420
        %v428 = vmul.f32 %v295, %v420
        %v429 = vmul.f32 %v300, %v420
        %v430 = vmul.f32 %v305, %v420
        %v431 = vmul.f32 %v310, %v420
        %v432 = vmul.f32 %v315, %v420
        %v433 = vmul.f32 %v320, %v420
        %v434 = vmul.f32 %v325, %v420
        %v435 = vmul.f32 %v330, %v420
        %v436 = vmul.f32 %v335, %v420
        %v437 = vmul.f32 %v340, %v420
        %v438 = vmul.f32 %v345, %v420
        %v439 = vmul.f32 %v350, %v420
        %v440 = vmul.f32 %v355, %v420
        %v441 = vmul.f32 %v360, %v420
        %v442 = vmul.f32 %v365, %v420
        %v443 = vmul.f32 %v370, %v420
        %v444 = vmul.f32 %v375, %v420
        %v445 = vmul.f32 %v380, %v420
        %v446 = vmul.f32 %v385, %v420
        %v447 = vmul.f32 %v390, %v420
        %v448 = vmul.f32 %v395, %v420
        %v449 = vmul.f32 %v400, %v420
        %v450 = vmul.f32 %v405, %v420
        %v451 = vmul.f32 %v410, %v420
        %v452 = vmul.f32 %v415, %v420
        %v453 = vadd.f32 %v255, %v421
        %v454 = vadd.f32 %v255, %v422
        %v455 = vadd.f32 %v255, %v423
        %v456 = vadd.f32 %v255, %v424
        %v457 = vadd.f32 %v255, %v425
        %v458 = vadd.f32 %v255, %v426
        %v459 = vadd.f32 %v255, %v427
        %v460 = vadd.f32 %v255, %v428
        %v461 = vadd.f32 %v255, %v429
        %v462 = vadd.f32 %v255, %v430
        %v463 = vadd.f32 %v255, %v431
        %v464 = vadd.f32 %v255, %v432
        %v465 = vadd.f32 %v255, %v433
        %v466 = vadd.f32 %v255, %v434
        %v467 = vadd.f32 %v255, %v435
        %v468 = vadd.f32 %v255, %v436
        %v469 = vadd.f32 %v255, %v437
        %v470 = vadd.f32 %v255, %v438
        %v471 = vadd.f32 %v255, %v439
        %v472 = vadd.f32 %v255, %v440
        %v473 = vadd.f32 %v255, %v441
        %v474 = vadd.f32 %v255, %v442
        %v475 = vadd.f32 %v255, %v443
        %v476 = vadd.f32 %v255, %v444
        %v477 = vadd.f32 %v255, %v445
        %v478 = vadd.f32 %v255, %v446
        %v479 = vadd.f32 %v255, %v447
        %v480 = vadd.f32 %v255, %v448
        %v481 = vadd.f32 %v255, %v449
        %v482 = vadd.f32 %v255, %v450
        %v483 = vadd.f32 %v255, %v451
        %v484 = vadd.f32 %v255, %v452
        %485 = vset.pattern.permute.xlu0 1
        %486 = vperm.xlu0 %485, %v217
        %v487 = vpop.permute.xlu0 %486
        %489 = vset.pattern.permute.xlu0 1
        %490 = vperm.xlu0 %489, %v218
        %v491 = vpop.permute.xlu0 %490
        %493 = vset.pattern.permute.xlu0 1
        %494 = vperm.xlu0 %493, %v219
        %v495 = vpop.permute.xlu0 %494
        %497 = vset.pattern.permute.xlu0 1
        %498 = vperm.xlu0 %497, %v220
        %v499 = vpop.permute.xlu0 %498
        %501 = vset.pattern.permute.xlu0 1
        %502 = vperm.xlu0 %501, %v221
        %v503 = vpop.permute.xlu0 %502
        %505 = vset.pattern.permute.xlu0 1
        %506 = vperm.xlu0 %505, %v222
        %v507 = vpop.permute.xlu0 %506
        %509 = vset.pattern.permute.xlu0 1
        %510 = vperm.xlu0 %509, %v223
        %v511 = vpop.permute.xlu0 %510
        %513 = vset.pattern.permute.xlu0 1
        %514 = vperm.xlu0 %513, %v224
        %v515 = vpop.permute.xlu0 %514
        %517 = vset.pattern.permute.xlu0 1
        %518 = vperm.xlu0 %517, %v225
        %v519 = vpop.permute.xlu0 %518
        %521 = vset.pattern.permute.xlu0 1
        %522 = vperm.xlu0 %521, %v226
        %v523 = vpop.permute.xlu0 %522
        %525 = vset.pattern.permute.xlu0 1
        %526 = vperm.xlu0 %525, %v227
        %v527 = vpop.permute.xlu0 %526
        %529 = vset.pattern.permute.xlu0 1
        %530 = vperm.xlu0 %529, %v228
        %v531 = vpop.permute.xlu0 %530
        %533 = vset.pattern.permute.xlu0 1
        %534 = vperm.xlu0 %533, %v229
        %v535 = vpop.permute.xlu0 %534
        %537 = vset.pattern.permute.xlu0 1
        %538 = vperm.xlu0 %537, %v230
        %v539 = vpop.permute.xlu0 %538
        %541 = vset.pattern.permute.xlu0 1
        %542 = vperm.xlu0 %541, %v231
        %v543 = vpop.permute.xlu0 %542
        %545 = vset.pattern.permute.xlu0 1
        %546 = vperm.xlu0 %545, %v232
        %v547 = vpop.permute.xlu0 %546
        %549 = vset.pattern.permute.xlu0 1
        %550 = vperm.xlu0 %549, %v233
        %v551 = vpop.permute.xlu0 %550
        %553 = vset.pattern.permute.xlu0 1
        %554 = vperm.xlu0 %553, %v234
        %v555 = vpop.permute.xlu0 %554
        %557 = vset.pattern.permute.xlu0 1
        %558 = vperm.xlu0 %557, %v235
        %v559 = vpop.permute.xlu0 %558
        %561 = vset.pattern.permute.xlu0 1
        %562 = vperm.xlu0 %561, %v236
        %v563 = vpop.permute.xlu0 %562
        %565 = vset.pattern.permute.xlu0 1
        %566 = vperm.xlu0 %565, %v237
        %v567 = vpop.permute.xlu0 %566
        %569 = vset.pattern.permute.xlu0 1
        %570 = vperm.xlu0 %569, %v238
        %v571 = vpop.permute.xlu0 %570
        %573 = vset.pattern.permute.xlu0 1
        %574 = vperm.xlu0 %573, %v239
        %v575 = vpop.permute.xlu0 %574
        %577 = vset.pattern.permute.xlu0 1
        %578 = vperm.xlu0 %577, %v240
        %v579 = vpop.permute.xlu0 %578
        %581 = vset.pattern.permute.xlu0 1
        %582 = vperm.xlu0 %581, %v241
        %v583 = vpop.permute.xlu0 %582
        %585 = vset.pattern.permute.xlu0 1
        %586 = vperm.xlu0 %585, %v242
        %v587 = vpop.permute.xlu0 %586
        %589 = vset.pattern.permute.xlu0 1
        %590 = vperm.xlu0 %589, %v243
        %v591 = vpop.permute.xlu0 %590
        %593 = vset.pattern.permute.xlu0 1
        %594 = vperm.xlu0 %593, %v244
        %v595 = vpop.permute.xlu0 %594
        %597 = vset.pattern.permute.xlu0 1
        %598 = vperm.xlu0 %597, %v245
        %v599 = vpop.permute.xlu0 %598
        %601 = vset.pattern.permute.xlu0 1
        %602 = vperm.xlu0 %601, %v246
        %v603 = vpop.permute.xlu0 %602
        %605 = vset.pattern.permute.xlu0 1
        %606 = vperm.xlu0 %605, %v247
        %v607 = vpop.permute.xlu0 %606
        %609 = vset.pattern.permute.xlu0 1
        %610 = vperm.xlu0 %609, %v248
        %v611 = vpop.permute.xlu0 %610
        %v613 = vlaneseq
        %v614 = vshrl.u32 %v613, 7
        %v615 = vsub.s32 1, %v614
        %v616 = vrot.slane %v249, %v615
        %v617 = vmul.f32 %v487, %v616
        %v618 = vmul.f32 %v491, %v616
        %v619 = vmul.f32 %v495, %v616
        %v620 = vmul.f32 %v499, %v616
        %v621 = vmul.f32 %v503, %v616
        %v622 = vmul.f32 %v507, %v616
        %v623 = vmul.f32 %v511, %v616
        %v624 = vmul.f32 %v515, %v616
        %v625 = vmul.f32 %v519, %v616
        %v626 = vmul.f32 %v523, %v616
        %v627 = vmul.f32 %v527, %v616
        %v628 = vmul.f32 %v531, %v616
        %v629 = vmul.f32 %v535, %v616
        %v630 = vmul.f32 %v539, %v616
        %v631 = vmul.f32 %v543, %v616
        %v632 = vmul.f32 %v547, %v616
        %v633 = vmul.f32 %v551, %v616
        %v634 = vmul.f32 %v555, %v616
        %v635 = vmul.f32 %v559, %v616
        %v636 = vmul.f32 %v563, %v616
        %v637 = vmul.f32 %v567, %v616
        %v638 = vmul.f32 %v571, %v616
        %v639 = vmul.f32 %v575, %v616
        %v640 = vmul.f32 %v579, %v616
        %v641 = vmul.f32 %v583, %v616
        %v642 = vmul.f32 %v587, %v616
        %v643 = vmul.f32 %v591, %v616
        %v644 = vmul.f32 %v595, %v616
        %v645 = vmul.f32 %v599, %v616
        %v646 = vmul.f32 %v603, %v616
        %v647 = vmul.f32 %v607, %v616
        %v648 = vmul.f32 %v611, %v616
        %v649 = vadd.f32 %v453, %v617
        %v650 = vadd.f32 %v454, %v618
        %v651 = vadd.f32 %v455, %v619
        %v652 = vadd.f32 %v456, %v620
        %v653 = vadd.f32 %v457, %v621
        %v654 = vadd.f32 %v458, %v622
        %v655 = vadd.f32 %v459, %v623
        %v656 = vadd.f32 %v460, %v624
        %v657 = vadd.f32 %v461, %v625
        %v658 = vadd.f32 %v462, %v626
        %v659 = vadd.f32 %v463, %v627
        %v660 = vadd.f32 %v464, %v628
        %v661 = vadd.f32 %v465, %v629
        %v662 = vadd.f32 %v466, %v630
        %v663 = vadd.f32 %v467, %v631
        %v664 = vadd.f32 %v468, %v632
        %v665 = vadd.f32 %v469, %v633
        %v666 = vadd.f32 %v470, %v634
        %v667 = vadd.f32 %v471, %v635
        %v668 = vadd.f32 %v472, %v636
        %v669 = vadd.f32 %v473, %v637
        %v670 = vadd.f32 %v474, %v638
        %v671 = vadd.f32 %v475, %v639
        %v672 = vadd.f32 %v476, %v640
        %v673 = vadd.f32 %v477, %v641
        %v674 = vadd.f32 %v478, %v642
        %v675 = vadd.f32 %v479, %v643
        %v676 = vadd.f32 %v480, %v644
        %v677 = vadd.f32 %v481, %v645
        %v678 = vadd.f32 %v482, %v646
        %v679 = vadd.f32 %v483, %v647
        %v680 = vadd.f32 %v484, %v648
        %681 = vset.pattern.permute.xlu0 2
        %682 = vperm.xlu0 %681, %v217
        %v683 = vpop.permute.xlu0 %682
        %685 = vset.pattern.permute.xlu0 2
        %686 = vperm.xlu0 %685, %v218
        %v687 = vpop.permute.xlu0 %686
        %689 = vset.pattern.permute.xlu0 2
        %690 = vperm.xlu0 %689, %v219
        %v691 = vpop.permute.xlu0 %690
        %693 = vset.pattern.permute.xlu0 2
        %694 = vperm.xlu0 %693, %v220
        %v695 = vpop.permute.xlu0 %694
        %697 = vset.pattern.permute.xlu0 2
        %698 = vperm.xlu0 %697, %v221
        %v699 = vpop.permute.xlu0 %698
        %701 = vset.pattern.permute.xlu0 2
        %702 = vperm.xlu0 %701, %v222
        %v703 = vpop.permute.xlu0 %702
        %705 = vset.pattern.permute.xlu0 2
        %706 = vperm.xlu0 %705, %v223
        %v707 = vpop.permute.xlu0 %706
        %709 = vset.pattern.permute.xlu0 2
        %710 = vperm.xlu0 %709, %v224
        %v711 = vpop.permute.xlu0 %710
        %713 = vset.pattern.permute.xlu0 2
        %714 = vperm.xlu0 %713, %v225
        %v715 = vpop.permute.xlu0 %714
        %717 = vset.pattern.permute.xlu0 2
        %718 = vperm.xlu0 %717, %v226
        %v719 = vpop.permute.xlu0 %718
        %721 = vset.pattern.permute.xlu0 2
        %722 = vperm.xlu0 %721, %v227
        %v723 = vpop.permute.xlu0 %722
        %725 = vset.pattern.permute.xlu0 2
        %726 = vperm.xlu0 %725, %v228
        %v727 = vpop.permute.xlu0 %726
        %729 = vset.pattern.permute.xlu0 2
        %730 = vperm.xlu0 %729, %v229
        %v731 = vpop.permute.xlu0 %730
        %733 = vset.pattern.permute.xlu0 2
        %734 = vperm.xlu0 %733, %v230
        %v735 = vpop.permute.xlu0 %734
        %737 = vset.pattern.permute.xlu0 2
        %738 = vperm.xlu0 %737, %v231
        %v739 = vpop.permute.xlu0 %738
        %741 = vset.pattern.permute.xlu0 2
        %742 = vperm.xlu0 %741, %v232
        %v743 = vpop.permute.xlu0 %742
        %745 = vset.pattern.permute.xlu0 2
        %746 = vperm.xlu0 %745, %v233
        %v747 = vpop.permute.xlu0 %746
        %749 = vset.pattern.permute.xlu0 2
        %750 = vperm.xlu0 %749, %v234
        %v751 = vpop.permute.xlu0 %750
        %753 = vset.pattern.permute.xlu0 2
        %754 = vperm.xlu0 %753, %v235
        %v755 = vpop.permute.xlu0 %754
        %757 = vset.pattern.permute.xlu0 2
        %758 = vperm.xlu0 %757, %v236
        %v759 = vpop.permute.xlu0 %758
        %761 = vset.pattern.permute.xlu0 2
        %762 = vperm.xlu0 %761, %v237
        %v763 = vpop.permute.xlu0 %762
        %765 = vset.pattern.permute.xlu0 2
        %766 = vperm.xlu0 %765, %v238
        %v767 = vpop.permute.xlu0 %766
        %769 = vset.pattern.permute.xlu0 2
        %770 = vperm.xlu0 %769, %v239
        %v771 = vpop.permute.xlu0 %770
        %773 = vset.pattern.permute.xlu0 2
        %774 = vperm.xlu0 %773, %v240
        %v775 = vpop.permute.xlu0 %774
        %777 = vset.pattern.permute.xlu0 2
        %778 = vperm.xlu0 %777, %v241
        %v779 = vpop.permute.xlu0 %778
        %781 = vset.pattern.permute.xlu0 2
        %782 = vperm.xlu0 %781, %v242
        %v783 = vpop.permute.xlu0 %782
        %785 = vset.pattern.permute.xlu0 2
        %786 = vperm.xlu0 %785, %v243
        %v787 = vpop.permute.xlu0 %786
        %789 = vset.pattern.permute.xlu0 2
        %790 = vperm.xlu0 %789, %v244
        %v791 = vpop.permute.xlu0 %790
        %793 = vset.pattern.permute.xlu0 2
        %794 = vperm.xlu0 %793, %v245
        %v795 = vpop.permute.xlu0 %794
        %797 = vset.pattern.permute.xlu0 2
        %798 = vperm.xlu0 %797, %v246
        %v799 = vpop.permute.xlu0 %798
        %801 = vset.pattern.permute.xlu0 2
        %802 = vperm.xlu0 %801, %v247
        %v803 = vpop.permute.xlu0 %802
        %805 = vset.pattern.permute.xlu0 2
        %806 = vperm.xlu0 %805, %v248
        %v807 = vpop.permute.xlu0 %806
        %v809 = vlaneseq
        %v810 = vshrl.u32 %v809, 7
        %v811 = vsub.s32 2, %v810
        %v812 = vrot.slane %v249, %v811
        %v813 = vmul.f32 %v683, %v812
        %v814 = vmul.f32 %v687, %v812
        %v815 = vmul.f32 %v691, %v812
        %v816 = vmul.f32 %v695, %v812
        %v817 = vmul.f32 %v699, %v812
        %v818 = vmul.f32 %v703, %v812
        %v819 = vmul.f32 %v707, %v812
        %v820 = vmul.f32 %v711, %v812
        %v821 = vmul.f32 %v715, %v812
        %v822 = vmul.f32 %v719, %v812
        %v823 = vmul.f32 %v723, %v812
        %v824 = vmul.f32 %v727, %v812
        %v825 = vmul.f32 %v731, %v812
        %v826 = vmul.f32 %v735, %v812
        %v827 = vmul.f32 %v739, %v812
        %v828 = vmul.f32 %v743, %v812
        %v829 = vmul.f32 %v747, %v812
        %v830 = vmul.f32 %v751, %v812
        %v831 = vmul.f32 %v755, %v812
        %v832 = vmul.f32 %v759, %v812
        %v833 = vmul.f32 %v763, %v812
        %v834 = vmul.f32 %v767, %v812
        %v835 = vmul.f32 %v771, %v812
        %v836 = vmul.f32 %v775, %v812
        %v837 = vmul.f32 %v779, %v812
        %v838 = vmul.f32 %v783, %v812
        %v839 = vmul.f32 %v787, %v812
        %v840 = vmul.f32 %v791, %v812
        %v841 = vmul.f32 %v795, %v812
        %v842 = vmul.f32 %v799, %v812
        %v843 = vmul.f32 %v803, %v812
        %v844 = vmul.f32 %v807, %v812
        %v845 = vadd.f32 %v649, %v813
        %v846 = vadd.f32 %v650, %v814
        %v847 = vadd.f32 %v651, %v815
        %v848 = vadd.f32 %v652, %v816
        %v849 = vadd.f32 %v653, %v817
        %v850 = vadd.f32 %v654, %v818
        %v851 = vadd.f32 %v655, %v819
        %v852 = vadd.f32 %v656, %v820
        %v853 = vadd.f32 %v657, %v821
        %v854 = vadd.f32 %v658, %v822
        %v855 = vadd.f32 %v659, %v823
        %v856 = vadd.f32 %v660, %v824
        %v857 = vadd.f32 %v661, %v825
        %v858 = vadd.f32 %v662, %v826
        %v859 = vadd.f32 %v663, %v827
        %v860 = vadd.f32 %v664, %v828
        %v861 = vadd.f32 %v665, %v829
        %v862 = vadd.f32 %v666, %v830
        %v863 = vadd.f32 %v667, %v831
        %v864 = vadd.f32 %v668, %v832
        %v865 = vadd.f32 %v669, %v833
        %v866 = vadd.f32 %v670, %v834
        %v867 = vadd.f32 %v671, %v835
        %v868 = vadd.f32 %v672, %v836
        %v869 = vadd.f32 %v673, %v837
        %v870 = vadd.f32 %v674, %v838
        %v871 = vadd.f32 %v675, %v839
        %v872 = vadd.f32 %v676, %v840
        %v873 = vadd.f32 %v677, %v841
        %v874 = vadd.f32 %v678, %v842
        %v875 = vadd.f32 %v679, %v843
        %v876 = vadd.f32 %v680, %v844
        %877 = vset.pattern.permute.xlu0 3
        %878 = vperm.xlu0 %877, %v217
        %v879 = vpop.permute.xlu0 %878
        %881 = vset.pattern.permute.xlu0 3
        %882 = vperm.xlu0 %881, %v218
        %v883 = vpop.permute.xlu0 %882
        %885 = vset.pattern.permute.xlu0 3
        %886 = vperm.xlu0 %885, %v219
        %v887 = vpop.permute.xlu0 %886
        %889 = vset.pattern.permute.xlu0 3
        %890 = vperm.xlu0 %889, %v220
        %v891 = vpop.permute.xlu0 %890
        %893 = vset.pattern.permute.xlu0 3
        %894 = vperm.xlu0 %893, %v221
        %v895 = vpop.permute.xlu0 %894
        %897 = vset.pattern.permute.xlu0 3
        %898 = vperm.xlu0 %897, %v222
        %v899 = vpop.permute.xlu0 %898
        %901 = vset.pattern.permute.xlu0 3
        %902 = vperm.xlu0 %901, %v223
        %v903 = vpop.permute.xlu0 %902
        %905 = vset.pattern.permute.xlu0 3
        %906 = vperm.xlu0 %905, %v224
        %v907 = vpop.permute.xlu0 %906
        %909 = vset.pattern.permute.xlu0 3
        %910 = vperm.xlu0 %909, %v225
        %v911 = vpop.permute.xlu0 %910
        %913 = vset.pattern.permute.xlu0 3
        %914 = vperm.xlu0 %913, %v226
        %v915 = vpop.permute.xlu0 %914
        %917 = vset.pattern.permute.xlu0 3
        %918 = vperm.xlu0 %917, %v227
        %v919 = vpop.permute.xlu0 %918
        %921 = vset.pattern.permute.xlu0 3
        %922 = vperm.xlu0 %921, %v228
        %v923 = vpop.permute.xlu0 %922
        %925 = vset.pattern.permute.xlu0 3
        %926 = vperm.xlu0 %925, %v229
        %v927 = vpop.permute.xlu0 %926
        %929 = vset.pattern.permute.xlu0 3
        %930 = vperm.xlu0 %929, %v230
        %v931 = vpop.permute.xlu0 %930
        %933 = vset.pattern.permute.xlu0 3
        %934 = vperm.xlu0 %933, %v231
        %v935 = vpop.permute.xlu0 %934
        %937 = vset.pattern.permute.xlu0 3
        %938 = vperm.xlu0 %937, %v232
        %v939 = vpop.permute.xlu0 %938
        %941 = vset.pattern.permute.xlu0 3
        %942 = vperm.xlu0 %941, %v233
        %v943 = vpop.permute.xlu0 %942
        %945 = vset.pattern.permute.xlu0 3
        %946 = vperm.xlu0 %945, %v234
        %v947 = vpop.permute.xlu0 %946
        %949 = vset.pattern.permute.xlu0 3
        %950 = vperm.xlu0 %949, %v235
        %v951 = vpop.permute.xlu0 %950
        %953 = vset.pattern.permute.xlu0 3
        %954 = vperm.xlu0 %953, %v236
        %v955 = vpop.permute.xlu0 %954
        %957 = vset.pattern.permute.xlu0 3
        %958 = vperm.xlu0 %957, %v237
        %v959 = vpop.permute.xlu0 %958
        %961 = vset.pattern.permute.xlu0 3
        %962 = vperm.xlu0 %961, %v238
        %v963 = vpop.permute.xlu0 %962
        %965 = vset.pattern.permute.xlu0 3
        %966 = vperm.xlu0 %965, %v239
        %v967 = vpop.permute.xlu0 %966
        %969 = vset.pattern.permute.xlu0 3
        %970 = vperm.xlu0 %969, %v240
        %v971 = vpop.permute.xlu0 %970
        %973 = vset.pattern.permute.xlu0 3
        %974 = vperm.xlu0 %973, %v241
        %v975 = vpop.permute.xlu0 %974
        %977 = vset.pattern.permute.xlu0 3
        %978 = vperm.xlu0 %977, %v242
        %v979 = vpop.permute.xlu0 %978
        %981 = vset.pattern.permute.xlu0 3
        %982 = vperm.xlu0 %981, %v243
        %v983 = vpop.permute.xlu0 %982
        %985 = vset.pattern.permute.xlu0 3
        %986 = vperm.xlu0 %985, %v244
        %v987 = vpop.permute.xlu0 %986
        %989 = vset.pattern.permute.xlu0 3
        %990 = vperm.xlu0 %989, %v245
        %v991 = vpop.permute.xlu0 %990
        %993 = vset.pattern.permute.xlu0 3
        %994 = vperm.xlu0 %993, %v246
        %v995 = vpop.permute.xlu0 %994
        %997 = vset.pattern.permute.xlu0 3
        %998 = vperm.xlu0 %997, %v247
        %v999 = vpop.permute.xlu0 %998
        %1001 = vset.pattern.permute.xlu0 3
        %1002 = vperm.xlu0 %1001, %v248
        %v1003 = vpop.permute.xlu0 %1002
        %v1005 = vlaneseq
        %v1006 = vshrl.u32 %v1005, 7
        %v1007 = vsub.s32 3, %v1006
        %v1008 = vrot.slane %v249, %v1007
        %v1009 = vmul.f32 %v879, %v1008
        %v1010 = vmul.f32 %v883, %v1008
        %v1011 = vmul.f32 %v887, %v1008
        %v1012 = vmul.f32 %v891, %v1008
        %v1013 = vmul.f32 %v895, %v1008
        %v1014 = vmul.f32 %v899, %v1008
        %v1015 = vmul.f32 %v903, %v1008
        %v1016 = vmul.f32 %v907, %v1008
        %v1017 = vmul.f32 %v911, %v1008
        %v1018 = vmul.f32 %v915, %v1008
        %v1019 = vmul.f32 %v919, %v1008
        %v1020 = vmul.f32 %v923, %v1008
        %v1021 = vmul.f32 %v927, %v1008
        %v1022 = vmul.f32 %v931, %v1008
        %v1023 = vmul.f32 %v935, %v1008
        %v1024 = vmul.f32 %v939, %v1008
        %v1025 = vmul.f32 %v943, %v1008
        %v1026 = vmul.f32 %v947, %v1008
        %v1027 = vmul.f32 %v951, %v1008
        %v1028 = vmul.f32 %v955, %v1008
        %v1029 = vmul.f32 %v959, %v1008
        %v1030 = vmul.f32 %v963, %v1008
        %v1031 = vmul.f32 %v967, %v1008
        %v1032 = vmul.f32 %v971, %v1008
        %v1033 = vmul.f32 %v975, %v1008
        %v1034 = vmul.f32 %v979, %v1008
        %v1035 = vmul.f32 %v983, %v1008
        %v1036 = vmul.f32 %v987, %v1008
        %v1037 = vmul.f32 %v991, %v1008
        %v1038 = vmul.f32 %v995, %v1008
        %v1039 = vmul.f32 %v999, %v1008
        %v1040 = vmul.f32 %v1003, %v1008
        %v1041 = vadd.f32 %v845, %v1009
        %v1042 = vadd.f32 %v846, %v1010
        %v1043 = vadd.f32 %v847, %v1011
        %v1044 = vadd.f32 %v848, %v1012
        %v1045 = vadd.f32 %v849, %v1013
        %v1046 = vadd.f32 %v850, %v1014
        %v1047 = vadd.f32 %v851, %v1015
        %v1048 = vadd.f32 %v852, %v1016
        %v1049 = vadd.f32 %v853, %v1017
        %v1050 = vadd.f32 %v854, %v1018
        %v1051 = vadd.f32 %v855, %v1019
        %v1052 = vadd.f32 %v856, %v1020
        %v1053 = vadd.f32 %v857, %v1021
        %v1054 = vadd.f32 %v858, %v1022
        %v1055 = vadd.f32 %v859, %v1023
        %v1056 = vadd.f32 %v860, %v1024
        %v1057 = vadd.f32 %v861, %v1025
        %v1058 = vadd.f32 %v862, %v1026
        %v1059 = vadd.f32 %v863, %v1027
        %v1060 = vadd.f32 %v864, %v1028
        %v1061 = vadd.f32 %v865, %v1029
        %v1062 = vadd.f32 %v866, %v1030
        %v1063 = vadd.f32 %v867, %v1031
        %v1064 = vadd.f32 %v868, %v1032
        %v1065 = vadd.f32 %v869, %v1033
        %v1066 = vadd.f32 %v870, %v1034
        %v1067 = vadd.f32 %v871, %v1035
        %v1068 = vadd.f32 %v872, %v1036
        %v1069 = vadd.f32 %v873, %v1037
        %v1070 = vadd.f32 %v874, %v1038
        %v1071 = vadd.f32 %v875, %v1039
        %v1072 = vadd.f32 %v876, %v1040
        %1073 = vst [vmem:[%s202] sm:$0xff] %v1041
        %1074 = vst [vmem:[%s202 + $0x8] sm:$0xff] %v1042
        %1075 = vst [vmem:[%s202 + $0x10] sm:$0xff] %v1043
        %1076 = vst [vmem:[%s202 + $0x18] sm:$0xff] %v1044
        %1077 = vst [vmem:[%s202 + $0x20] sm:$0xff] %v1045
        %1078 = vst [vmem:[%s202 + $0x28] sm:$0xff] %v1046
        %1079 = vst [vmem:[%s202 + $0x30] sm:$0xff] %v1047
        %1080 = vst [vmem:[%s202 + $0x38] sm:$0xff] %v1048
        %1081 = vst [vmem:[%s202 + $0x40] sm:$0xff] %v1049
        %1082 = vst [vmem:[%s202 + $0x48] sm:$0xff] %v1050
        %1083 = vst [vmem:[%s202 + $0x50] sm:$0xff] %v1051
        %1084 = vst [vmem:[%s202 + $0x58] sm:$0xff] %v1052
        %1085 = vst [vmem:[%s202 + $0x60] sm:$0xff] %v1053
        %1086 = vst [vmem:[%s202 + $0x68] sm:$0xff] %v1054
        %1087 = vst [vmem:[%s202 + $0x70] sm:$0xff] %v1055
        %1088 = vst [vmem:[%s202 + $0x78] sm:$0xff] %v1056
        %1089 = vst [vmem:[%s202 + $0x80] sm:$0xff] %v1057
        %1090 = vst [vmem:[%s202 + $0x88] sm:$0xff] %v1058
        %1091 = vst [vmem:[%s202 + $0x90] sm:$0xff] %v1059
        %1092 = vst [vmem:[%s202 + $0x98] sm:$0xff] %v1060
        %1093 = vst [vmem:[%s202 + $0xa0] sm:$0xff] %v1061
        %1094 = vst [vmem:[%s202 + $0xa8] sm:$0xff] %v1062
        %1095 = vst [vmem:[%s202 + $0xb0] sm:$0xff] %v1063
        %1096 = vst [vmem:[%s202 + $0xb8] sm:$0xff] %v1064
        %1097 = vst [vmem:[%s202 + $0xc0] sm:$0xff] %v1065
        %1098 = vst [vmem:[%s202 + $0xc8] sm:$0xff] %v1066
        %1099 = vst [vmem:[%s202 + $0xd0] sm:$0xff] %v1067
        %1100 = vst [vmem:[%s202 + $0xd8] sm:$0xff] %v1068
        %1101 = vst [vmem:[%s202 + $0xe0] sm:$0xff] %v1069
        %1102 = vst [vmem:[%s202 + $0xe8] sm:$0xff] %v1070
        %1103 = vst [vmem:[%s202 + $0xf0] sm:$0xff] %v1071
        %1104 = vst [vmem:[%s202 + $0xf8] sm:$0xff] %v1072
        %s1105 = sand.u32 %s117, 1
        %s1106 = scalar_lea.sflag [#allocation3], %s1105
        %s1107 = sand.u32 %s117, 1
        %s1108 = smul.addr %s1107, 256
        %s1109 = scalar_lea.vmem [#allocation2], %s1108
        // Predicated region
        $region33: #{tpu_custom_call.1} parent=31 // pred_check
          %p1110 = pneg %p127
        $region34: #{tpu_custom_call.1} parent=31 // pred_check_branch
          %1112 = sbr.rel (%p1110) target = $region36
        $region35: #{tpu_custom_call.1} parent=31 // pred_region
          %s1113 = smul.u32 32, %s21
          %s1115 = ssub.s32 4096, 4096
          %1116 = vsyncadd %s1106, %s1115
          %s1117 = sadd.s32 %s22, %s1113
          %s1118 = smul.addr %s1117, 128
          %s1119 = scalar_lea.hbm %s3, %s1118
          %s1120 = sshll.u32 %s1109, 4
          %s1121 = int_to_ptr.vmem [resolvable:$true] %s1120
          %1126 = dma.vmem_to_hbm [thread:$0]  %s1121, 4096, %s1119, %s1106, 128, 128, 8
        $region36: #{tpu_custom_call.1} parent=31 // pred_fallthru
          _
      $region32: #{tpu_custom_call.1} parent=5 // pred_fallthru
        _
      %p1127 = scmp.le.s32.totalorder 2, %s12
      // Predicated region
      $region37: #{tpu_custom_call.1} parent=5 // pred_check
        %p1128 = pneg %p1127
      $region38: #{tpu_custom_call.1} parent=5 // pred_check_branch
        %1130 = sbr.rel (%p1128) target = $region40
      $region39: #{tpu_custom_call.1} parent=5 // pred_region
        %s1131 = ssub.s32 %s12, 2
        // Predicated region
        $region41: #{tpu_custom_call.1} parent=39 // pred_check
          %p1132 = pneg %p133
        $region42: #{tpu_custom_call.1} parent=39 // pred_check_branch
          %1134 = sbr.rel (%p1132) target = $region44
        $region43: #{tpu_custom_call.1} parent=39 // pred_region
          %s1135 = sand.u32 %s118, 1
          %s1136 = scalar_lea.sflag [#allocation3], %s1135
          %s1137 = sand.u32 %s118, 1
          %s1138 = smul.addr %s1137, 256
          %s1139 = scalar_lea.vmem [#allocation2], %s1138
          %1140 = dma.done %s1136, 4096
        $region44: #{tpu_custom_call.1} parent=39 // pred_fallthru
          _
      $region40: #{tpu_custom_call.1} parent=5 // pred_fallthru
        _
    $region6: #{tpu_custom_call.1} parent=1 // loop_footer
      %s16 = sadd.s32 1, %s12
    $region7: #{tpu_custom_call.1} parent=1 // loop_footer_branch
      %11 = sbr.rel target = $region3
    $region8: #{tpu_custom_call.1} parent=1 // loop_exit
      _
    %1141 = vsyncpa [#allocation3], 1
    %s1142 = scalar_lea.sflag [#allocation3], 1
    %1143 = vsyncpa %s1142, 1

// kernel: tpu_custom_call.1
$region0: #{tpu_custom_call.1}
  #allocation0 [shape = 'u32[]', space=smem, size = 0x4, offset = 0x4, fixed_abs, tag = 'smem constant byte address 0x4 - core index']
  #allocation1 [shape = 'u32[144,128]{1,0:T(1,128)}', space=vmem, size = 0x12000, scoped, tag = 'internal scratch']
  %s0 = inlined_call_operand.vmem [shape: f32[512,4], index: 0, kind: input, shape index: {}]
  %s1 = inlined_call_operand.vmem [shape: f32[4,128], index: 1, kind: input, shape index: {}]
  %s2 = inlined_call_operand.vmem [shape: f32[1,128], index: 2, kind: input, shape index: {}]
  %s3 = inlined_call_operand.hbm [shape: f32[512,128], index: 3, kind: output, shape index: {}]
  %s4 = sld [smem:[#allocation0]]
  $region45: #{tpu_custom_call.1} parent=0
    _
  %s6 = ssub.s32 1, %s4
  %s7 = scalar_select 0, %s6, %s4
  $region1: #{tpu_custom_call.1} parent=0
    #allocation2 [shape = 'u8[262144]{0}', space=vmem, size = 0x40000, scoped, tag = 'output window, operand 0']
    #allocation3 [shape = 's32[2]{0}', space=sflag, size = 0x8, scoped, tag = 'scoped memory for tpu_custom_call.1']
    %8 = vsyncpa [#allocation3], 0
    %s9 = scalar_lea.sflag [#allocation3], 1
    %10 = vsyncpa %s9, 0
    loop: start=0, step=1, limit=4
    $region2: #{tpu_custom_call.1} parent=1 // loop_pre_header
      _
    $region3: #{tpu_custom_call.1} parent=1 // loop_header
      %s12 = sphi 0, %s16
      %p13 = scmp.ge.s32.totalorder %s12, 4
      %s19 = sphi 0, %s31
      %s20 = sphi 0, %s27
      %s21 = sphi 0, %s19
      %s22 = sphi 0, %s20
      %s23 = sphi 0, %s21
      %s24 = sphi 0, %s22
      %s34 = sphi 0, %s36
      %s37 = sphi 0, %s34
      %s38 = sphi 0, %s37
      %s54 = sphi 0, %s38
      %s60 = sphi 0, %s62
      %s63 = sphi 0, %s60
      %s64 = sphi 0, %s63
      %s80 = sphi 0, %s64
      %s86 = sphi 0, %s88
      %s89 = sphi 0, %s86
      %s90 = sphi 0, %s89
      %s106 = sphi 0, %s90
      %s114 = sphi 0, %s116
      %s117 = sphi 0, %s114
      %s118 = sphi 0, %s117
      %s134 = sphi 0, %s118
    $region4: #{tpu_custom_call.1} parent=1 // loop_header_branch
      %15 = sbr.rel (%p13) target = $region8
    $region5: #{tpu_custom_call.1} parent=1 // loop_body
      %s17 = ssub.s32 %s12, 1
      %s18 = ssub.s32 %s12, 2
      %s25 = sadd.s32 1, %s20
      %p26 = scmp.ge.s32.totalorder %s25, 1
      %s27 = scalar_select %p26, 0, %s25
      %s28 = sadd.s32 1, %s19
      %s29 = scalar_select %p26, %s28, %s19
      %p30 = scmp.ge.s32.totalorder %s29, 2
      %s31 = scalar_select %p30, 0, %s29
      %s32 = ssub.s32 %s19, %s31
      %p33 = scmp.eq.s32.totalorder %s32, 0
      %s35 = sadd.s32 %s34, 1
      %s36 = scalar_select %p33, %s34, %s35
      %p39 = pneg %p33
      %p40 = scmp.eq.s32.totalorder %s12, 1
      %p41 = por %p39, %p40
      %p42 = scmp.ne.s32.totalorder %s34, %s37
      %p43 = scmp.eq.s32.totalorder %s12, 0
      %p44 = por %p42, %p43
      %p45 = scmp.ne.s32.totalorder %s34, %s37
      %p46 = scmp.eq.s32.totalorder %s17, 1
      %p47 = por %p45, %p46
      %p48 = scmp.ne.s32.totalorder %s37, %s38
      %p49 = scmp.eq.s32.totalorder %s17, 0
      %p50 = por %p48, %p49
      %p51 = scmp.ne.s32.totalorder %s37, %s38
      %p52 = scmp.eq.s32.totalorder %s18, 1
      %p53 = por %p51, %p52
      %p55 = scmp.ne.s32.totalorder %s38, %s54
      %p56 = scmp.eq.s32.totalorder %s18, 0
      %p57 = por %p55, %p56
      %s58 = ssub.s32 %s20, %s27
      %p59 = scmp.eq.s32.totalorder %s58, 0
      %s61 = sadd.s32 %s60, 1
      %s62 = scalar_select %p59, %s60, %s61
      %p65 = pneg %p59
      %p66 = scmp.eq.s32.totalorder %s12, 1
      %p67 = por %p65, %p66
      %p68 = scmp.ne.s32.totalorder %s60, %s63
      %p69 = scmp.eq.s32.totalorder %s12, 0
      %p70 = por %p68, %p69
      %p71 = scmp.ne.s32.totalorder %s60, %s63
      %p72 = scmp.eq.s32.totalorder %s17, 1
      %p73 = por %p71, %p72
      %p74 = scmp.ne.s32.totalorder %s63, %s64
      %p75 = scmp.eq.s32.totalorder %s17, 0
      %p76 = por %p74, %p75
      %p77 = scmp.ne.s32.totalorder %s63, %s64
      %p78 = scmp.eq.s32.totalorder %s18, 1
      %p79 = por %p77, %p78
      %p81 = scmp.ne.s32.totalorder %s64, %s80
      %p82 = scmp.eq.s32.totalorder %s18, 0
      %p83 = por %p81, %p82
      %s84 = ssub.s32 %s20, %s27
      %p85 = scmp.eq.s32.totalorder %s84, 0
      %s87 = sadd.s32 %s86, 1
      %s88 = scalar_select %p85, %s86, %s87
      %p91 = pneg %p85
      %p92 = scmp.eq.s32.totalorder %s12, 1
      %p93 = por %p91, %p92
      %p94 = scmp.ne.s32.totalorder %s86, %s89
      %p95 = scmp.eq.s32.totalorder %s12, 0
      %p96 = por %p94, %p95
      %p97 = scmp.ne.s32.totalorder %s86, %s89
      %p98 = scmp.eq.s32.totalorder %s17, 1
      %p99 = por %p97, %p98
      %p100 = scmp.ne.s32.totalorder %s89, %s90
      %p101 = scmp.eq.s32.totalorder %s17, 0
      %p102 = por %p100, %p101
      %p103 = scmp.ne.s32.totalorder %s89, %s90
      %p104 = scmp.eq.s32.totalorder %s18, 1
      %p105 = por %p103, %p104
      %p107 = scmp.ne.s32.totalorder %s90, %s106
      %p108 = scmp.eq.s32.totalorder %s18, 0
      %p109 = por %p107, %p108
      %s110 = ssub.s32 %s19, %s31
      %s111 = ssub.s32 %s20, %s27
      %s112 = sor.u32 %s110, %s111
      %p113 = scmp.eq.s32.totalorder %s112, 0
      %s115 = sadd.s32 %s114, 1
      %s116 = scalar_select %p113, %s114, %s115
      %p119 = pneg %p113
      %p120 = scmp.eq.s32.totalorder %s12, 1
      %p121 = por %p119, %p120
      %p122 = scmp.ne.s32.totalorder %s114, %s117
      %p123 = scmp.eq.s32.totalorder %s12, 0
      %p124 = por %p122, %p123
      %p125 = scmp.ne.s32.totalorder %s114, %s117
      %p126 = scmp.eq.s32.totalorder %s17, 1
      %p127 = por %p125, %p126
      %p128 = scmp.ne.s32.totalorder %s117, %s118
      %p129 = scmp.eq.s32.totalorder %s17, 0
      %p130 = por %p128, %p129
      %p131 = scmp.ne.s32.totalorder %s117, %s118
      %p132 = scmp.eq.s32.totalorder %s18, 1
      %p133 = por %p131, %p132
      %p135 = scmp.ne.s32.totalorder %s118, %s134
      %p136 = scmp.eq.s32.totalorder %s18, 0
      %p137 = por %p135, %p136
      %p138 = scmp.le.s32.totalorder 1, %s12
      %p139 = scmp.lt.s32.totalorder %s12, 3
      %p140 = pnand %p138, %p139
      %p141 = pneg %p140
      // Predicated region
      $region9: #{tpu_custom_call.1} parent=5 // pred_check
        _
      $region10: #{tpu_custom_call.1} parent=5 // pred_check_branch
        %143 = sbr.rel (%p140) target = $region12
      $region11: #{tpu_custom_call.1} parent=5 // pred_region
        %s144 = ssub.s32 %s12, 1
        // Predicated region
        $region13: #{tpu_custom_call.1} parent=11 // pred_check
          %p145 = pneg %p76
        $region14: #{tpu_custom_call.1} parent=11 // pred_check_branch
          %147 = sbr.rel (%p145) target = $region16
        $region15: #{tpu_custom_call.1} parent=11 // pred_region
          %p148 = scmp.lt.s32.totalorder %s22, 0
          %s149 = scalar_select %p148, %s22, 0
          %s150 = smul.addr %s149, 4
          %s151 = scalar_lea.vmem %s1, %s150
        $region16: #{tpu_custom_call.1} parent=11 // pred_fallthru
          _
        // Predicated region
        $region17: #{tpu_custom_call.1} parent=11 // pred_check
          %p152 = pneg %p102
        $region18: #{tpu_custom_call.1} parent=11 // pred_check_branch
          %154 = sbr.rel (%p152) target = $region20
        $region19: #{tpu_custom_call.1} parent=11 // pred_region
          %p155 = scmp.lt.s32.totalorder %s22, 0
          %s156 = scalar_select %p155, %s22, 0
          %s157 = scalar_lea.vmem %s2, %s156
        $region20: #{tpu_custom_call.1} parent=11 // pred_fallthru
          _
      $region12: #{tpu_custom_call.1} parent=5 // pred_fallthru
        _
      %p158 = scmp.lt.s32.totalorder %s12, 2
      // Predicated region
      $region21: #{tpu_custom_call.1} parent=5 // pred_check
        %p159 = pneg %p158
      $region22: #{tpu_custom_call.1} parent=5 // pred_check_branch
        %161 = sbr.rel (%p159) target = $region24
      $region23: #{tpu_custom_call.1} parent=5 // pred_region
        // Predicated region
        $region25: #{tpu_custom_call.1} parent=23 // pred_check
          %p162 = pneg %p44
        $region26: #{tpu_custom_call.1} parent=23 // pred_check_branch
          %164 = sbr.rel (%p162) target = $region28
        $region27: #{tpu_custom_call.1} parent=23 // pred_region
          %s165 = smul.u32 32, %s19
          %p166 = scmp.lt.s32.totalorder %s165, 63
          %s167 = scalar_select %p166, %s165, 63
          %s168 = smul.addr %s167, 8
          %s169 = scalar_lea.vmem %s0, %s168
          %s170 = smul.u32 32, %s19
        $region28: #{tpu_custom_call.1} parent=23 // pred_fallthru
          _
      $region24: #{tpu_custom_call.1} parent=5 // pred_fallthru
        _
      %p171 = scmp.le.s32.totalorder 1, %s12
      %p172 = scmp.lt.s32.totalorder %s12, 3
      %p173 = pnand %p171, %p172
      %p174 = pneg %p173
      // Predicated region
      $region29: #{tpu_custom_call.1} parent=5 // pred_check
        _
      $region30: #{tpu_custom_call.1} parent=5 // pred_check_branch
        %176 = sbr.rel (%p173) target = $region32
      $region31: #{tpu_custom_call.1} parent=5 // pred_region
        %s177 = ssub.s32 %s12, 1
        %s178 = smul.u32 32, %s21
        %p179 = scmp.lt.s32.totalorder %s178, 63
        %s180 = scalar_select %p179, %s178, 63
        %s181 = smul.addr %s180, 8
        %s182 = scalar_lea.vmem %s0, %s181
        %p183 = pneg %p50
        %p184 = pneg %p47
        %p185 = scmp.lt.s32.totalorder %s22, 0
        %s186 = scalar_select %p185, %s22, 0
        %s187 = smul.addr %s186, 4
        %s188 = scalar_lea.vmem %s1, %s187
        %p189 = pneg %p76
        %p190 = pneg %p73
        %p191 = scmp.lt.s32.totalorder %s22, 0
        %s192 = scalar_select %p191, %s22, 0
        %s193 = scalar_lea.vmem %s2, %s192
        %p194 = pneg %p102
        %p195 = pneg %p99
        %p196 = pneg %p130
        %p197 = pneg %p127
        %s198 = sand.u32 %s117, 1
        %s199 = scalar_lea.sflag [#allocation3], %s198
        %s200 = sand.u32 %s117, 1
        %s201 = smul.addr %s200, 256
        %s202 = scalar_lea.vmem [#allocation2], %s201
        %s203 = smul.u32 32, %s21
        %p204 = scmp.lt.s32.totalorder %s203, 63
        %s205 = scalar_select %p204, %s203, 63
        %s206 = smul.addr %s205, 8
        %s207 = scalar_lea.vmem %s0, %s206
        %s208 = smul.u32 32, %s21
        %p209 = scmp.lt.s32.totalorder %s22, 0
        %s210 = scalar_select %p209, %s22, 0
        %s211 = smul.addr %s210, 4
        %s212 = scalar_lea.vmem %s1, %s211
        %p213 = scmp.lt.s32.totalorder %s22, 0
        %s214 = scalar_select %p213, %s22, 0
        %s215 = scalar_lea.vmem %s2, %s214
        %s216 = smul.u32 32, %s21
        %v217 = vld [vmem:[%s207] sm:$0xff]
        %v218 = vld [vmem:[%s207 + $0x8] sm:$0xff]
        %v219 = vld [vmem:[%s207 + $0x10] sm:$0xff]
        %v220 = vld [vmem:[%s207 + $0x18] sm:$0xff]
        %v221 = vld [vmem:[%s207 + $0x20] sm:$0xff]
        %v222 = vld [vmem:[%s207 + $0x28] sm:$0xff]
        %v223 = vld [vmem:[%s207 + $0x30] sm:$0xff]
        %v224 = vld [vmem:[%s207 + $0x38] sm:$0xff]
        %v225 = vld [vmem:[%s207 + $0x40] sm:$0xff]
        %v226 = vld [vmem:[%s207 + $0x48] sm:$0xff]
        %v227 = vld [vmem:[%s207 + $0x50] sm:$0xff]
        %v228 = vld [vmem:[%s207 + $0x58] sm:$0xff]
        %v229 = vld [vmem:[%s207 + $0x60] sm:$0xff]
        %v230 = vld [vmem:[%s207 + $0x68] sm:$0xff]
        %v231 = vld [vmem:[%s207 + $0x70] sm:$0xff]
        %v232 = vld [vmem:[%s207 + $0x78] sm:$0xff]
        %v233 = vld [vmem:[%s207 + $0x80] sm:$0xff]
        %v234 = vld [vmem:[%s207 + $0x88] sm:$0xff]
        %v235 = vld [vmem:[%s207 + $0x90] sm:$0xff]
        %v236 = vld [vmem:[%s207 + $0x98] sm:$0xff]
        %v237 = vld [vmem:[%s207 + $0xa0] sm:$0xff]
        %v238 = vld [vmem:[%s207 + $0xa8] sm:$0xff]
        %v239 = vld [vmem:[%s207 + $0xb0] sm:$0xff]
        %v240 = vld [vmem:[%s207 + $0xb8] sm:$0xff]
        %v241 = vld [vmem:[%s207 + $0xc0] sm:$0xff]
        %v242 = vld [vmem:[%s207 + $0xc8] sm:$0xff]
        %v243 = vld [vmem:[%s207 + $0xd0] sm:$0xff]
        %v244 = vld [vmem:[%s207 + $0xd8] sm:$0xff]
        %v245 = vld [vmem:[%s207 + $0xe0] sm:$0xff]
        %v246 = vld [vmem:[%s207 + $0xe8] sm:$0xff]
        %v247 = vld [vmem:[%s207 + $0xf0] sm:$0xff]
        %v248 = vld [vmem:[%s207 + $0xf8] sm:$0xff]
        %v249 = vld [vmem:[%s212] sm:$0xf]
        %v250 = vld [vmem:[%s215] sm:$0x1]
        %v252 = vlaneseq
        %v253 = vshrl.u32 %v252, 7
        %v254 = vsub.s32 0, %v253
        %v255 = vrot.slane %v250, %v254
        %258 = vset.pattern.permute.xlu0 0
        %259 = vperm.xlu0 %258, %v217
        %v260 = vpop.permute.xlu0 %259
        %263 = vset.pattern.permute.xlu0 0
        %264 = vperm.xlu0 %263, %v218
        %v265 = vpop.permute.xlu0 %264
        %268 = vset.pattern.permute.xlu0 0
        %269 = vperm.xlu0 %268, %v219
        %v270 = vpop.permute.xlu0 %269
        %273 = vset.pattern.permute.xlu0 0
        %274 = vperm.xlu0 %273, %v220
        %v275 = vpop.permute.xlu0 %274
        %278 = vset.pattern.permute.xlu0 0
        %279 = vperm.xlu0 %278, %v221
        %v280 = vpop.permute.xlu0 %279
        %283 = vset.pattern.permute.xlu0 0
        %284 = vperm.xlu0 %283, %v222
        %v285 = vpop.permute.xlu0 %284
        %288 = vset.pattern.permute.xlu0 0
        %289 = vperm.xlu0 %288, %v223
        %v290 = vpop.permute.xlu0 %289
        %293 = vset.pattern.permute.xlu0 0
        %294 = vperm.xlu0 %293, %v224
        %v295 = vpop.permute.xlu0 %294
        %298 = vset.pattern.permute.xlu0 0
        %299 = vperm.xlu0 %298, %v225
        %v300 = vpop.permute.xlu0 %299
        %303 = vset.pattern.permute.xlu0 0
        %304 = vperm.xlu0 %303, %v226
        %v305 = vpop.permute.xlu0 %304
        %308 = vset.pattern.permute.xlu0 0
        %309 = vperm.xlu0 %308, %v227
        %v310 = vpop.permute.xlu0 %309
        %313 = vset.pattern.permute.xlu0 0
        %314 = vperm.xlu0 %313, %v228
        %v315 = vpop.permute.xlu0 %314
        %318 = vset.pattern.permute.xlu0 0
        %319 = vperm.xlu0 %318, %v229
        %v320 = vpop.permute.xlu0 %319
        %323 = vset.pattern.permute.xlu0 0
        %324 = vperm.xlu0 %323, %v230
        %v325 = vpop.permute.xlu0 %324
        %328 = vset.pattern.permute.xlu0 0
        %329 = vperm.xlu0 %328, %v231
        %v330 = vpop.permute.xlu0 %329
        %333 = vset.pattern.permute.xlu0 0
        %334 = vperm.xlu0 %333, %v232
        %v335 = vpop.permute.xlu0 %334
        %338 = vset.pattern.permute.xlu0 0
        %339 = vperm.xlu0 %338, %v233
        %v340 = vpop.permute.xlu0 %339
        %343 = vset.pattern.permute.xlu0 0
        %344 = vperm.xlu0 %343, %v234
        %v345 = vpop.permute.xlu0 %344
        %348 = vset.pattern.permute.xlu0 0
        %349 = vperm.xlu0 %348, %v235
        %v350 = vpop.permute.xlu0 %349
        %353 = vset.pattern.permute.xlu0 0
        %354 = vperm.xlu0 %353, %v236
        %v355 = vpop.permute.xlu0 %354
        %358 = vset.pattern.permute.xlu0 0
        %359 = vperm.xlu0 %358, %v237
        %v360 = vpop.permute.xlu0 %359
        %363 = vset.pattern.permute.xlu0 0
        %364 = vperm.xlu0 %363, %v238
        %v365 = vpop.permute.xlu0 %364
        %368 = vset.pattern.permute.xlu0 0
        %369 = vperm.xlu0 %368, %v239
        %v370 = vpop.permute.xlu0 %369
        %373 = vset.pattern.permute.xlu0 0
        %374 = vperm.xlu0 %373, %v240
        %v375 = vpop.permute.xlu0 %374
        %378 = vset.pattern.permute.xlu0 0
        %379 = vperm.xlu0 %378, %v241
        %v380 = vpop.permute.xlu0 %379
        %383 = vset.pattern.permute.xlu0 0
        %384 = vperm.xlu0 %383, %v242
        %v385 = vpop.permute.xlu0 %384
        %388 = vset.pattern.permute.xlu0 0
        %389 = vperm.xlu0 %388, %v243
        %v390 = vpop.permute.xlu0 %389
        %393 = vset.pattern.permute.xlu0 0
        %394 = vperm.xlu0 %393, %v244
        %v395 = vpop.permute.xlu0 %394
        %398 = vset.pattern.permute.xlu0 0
        %399 = vperm.xlu0 %398, %v245
        %v400 = vpop.permute.xlu0 %399
        %403 = vset.pattern.permute.xlu0 0
        %404 = vperm.xlu0 %403, %v246
        %v405 = vpop.permute.xlu0 %404
        %408 = vset.pattern.permute.xlu0 0
        %409 = vperm.xlu0 %408, %v247
        %v410 = vpop.permute.xlu0 %409
        %413 = vset.pattern.permute.xlu0 0
        %414 = vperm.xlu0 %413, %v248
        %v415 = vpop.permute.xlu0 %414
        %v417 = vlaneseq
        %v418 = vshrl.u32 %v417, 7
        %v419 = vsub.s32 0, %v418
        %v420 = vrot.slane %v249, %v419
        %v421 = vmul.f32 %v260, %v420
        %v422 = vmul.f32 %v265, %v420
        %v423 = vmul.f32 %v270, %v420
        %v424 = vmul.f32 %v275, %v420
        %v425 = vmul.f32 %v280, %v420
        %v426 = vmul.f32 %v285, %v420
        %v427 = vmul.f32 %v290, %v420
        %v428 = vmul.f32 %v295, %v420
        %v429 = vmul.f32 %v300, %v420
        %v430 = vmul.f32 %v305, %v420
        %v431 = vmul.f32 %v310, %v420
        %v432 = vmul.f32 %v315, %v420
        %v433 = vmul.f32 %v320, %v420
        %v434 = vmul.f32 %v325, %v420
        %v435 = vmul.f32 %v330, %v420
        %v436 = vmul.f32 %v335, %v420
        %v437 = vmul.f32 %v340, %v420
        %v438 = vmul.f32 %v345, %v420
        %v439 = vmul.f32 %v350, %v420
        %v440 = vmul.f32 %v355, %v420
        %v441 = vmul.f32 %v360, %v420
        %v442 = vmul.f32 %v365, %v420
        %v443 = vmul.f32 %v370, %v420
        %v444 = vmul.f32 %v375, %v420
        %v445 = vmul.f32 %v380, %v420
        %v446 = vmul.f32 %v385, %v420
        %v447 = vmul.f32 %v390, %v420
        %v448 = vmul.f32 %v395, %v420
        %v449 = vmul.f32 %v400, %v420
        %v450 = vmul.f32 %v405, %v420
        %v451 = vmul.f32 %v410, %v420
        %v452 = vmul.f32 %v415, %v420
        %v453 = vadd.f32 %v255, %v421
        %v454 = vadd.f32 %v255, %v422
        %v455 = vadd.f32 %v255, %v423
        %v456 = vadd.f32 %v255, %v424
        %v457 = vadd.f32 %v255, %v425
        %v458 = vadd.f32 %v255, %v426
        %v459 = vadd.f32 %v255, %v427
        %v460 = vadd.f32 %v255, %v428
        %v461 = vadd.f32 %v255, %v429
        %v462 = vadd.f32 %v255, %v430
        %v463 = vadd.f32 %v255, %v431
        %v464 = vadd.f32 %v255, %v432
        %v465 = vadd.f32 %v255, %v433
        %v466 = vadd.f32 %v255, %v434
        %v467 = vadd.f32 %v255, %v435
        %v468 = vadd.f32 %v255, %v436
        %v469 = vadd.f32 %v255, %v437
        %v470 = vadd.f32 %v255, %v438
        %v471 = vadd.f32 %v255, %v439
        %v472 = vadd.f32 %v255, %v440
        %v473 = vadd.f32 %v255, %v441
        %v474 = vadd.f32 %v255, %v442
        %v475 = vadd.f32 %v255, %v443
        %v476 = vadd.f32 %v255, %v444
        %v477 = vadd.f32 %v255, %v445
        %v478 = vadd.f32 %v255, %v446
        %v479 = vadd.f32 %v255, %v447
        %v480 = vadd.f32 %v255, %v448
        %v481 = vadd.f32 %v255, %v449
        %v482 = vadd.f32 %v255, %v450
        %v483 = vadd.f32 %v255, %v451
        %v484 = vadd.f32 %v255, %v452
        %485 = vset.pattern.permute.xlu0 1
        %486 = vperm.xlu0 %485, %v217
        %v487 = vpop.permute.xlu0 %486
        %489 = vset.pattern.permute.xlu0 1
        %490 = vperm.xlu0 %489, %v218
        %v491 = vpop.permute.xlu0 %490
        %493 = vset.pattern.permute.xlu0 1
        %494 = vperm.xlu0 %493, %v219
        %v495 = vpop.permute.xlu0 %494
        %497 = vset.pattern.permute.xlu0 1
        %498 = vperm.xlu0 %497, %v220
        %v499 = vpop.permute.xlu0 %498
        %501 = vset.pattern.permute.xlu0 1
        %502 = vperm.xlu0 %501, %v221
        %v503 = vpop.permute.xlu0 %502
        %505 = vset.pattern.permute.xlu0 1
        %506 = vperm.xlu0 %505, %v222
        %v507 = vpop.permute.xlu0 %506
        %509 = vset.pattern.permute.xlu0 1
        %510 = vperm.xlu0 %509, %v223
        %v511 = vpop.permute.xlu0 %510
        %513 = vset.pattern.permute.xlu0 1
        %514 = vperm.xlu0 %513, %v224
        %v515 = vpop.permute.xlu0 %514
        %517 = vset.pattern.permute.xlu0 1
        %518 = vperm.xlu0 %517, %v225
        %v519 = vpop.permute.xlu0 %518
        %521 = vset.pattern.permute.xlu0 1
        %522 = vperm.xlu0 %521, %v226
        %v523 = vpop.permute.xlu0 %522
        %525 = vset.pattern.permute.xlu0 1
        %526 = vperm.xlu0 %525, %v227
        %v527 = vpop.permute.xlu0 %526
        %529 = vset.pattern.permute.xlu0 1
        %530 = vperm.xlu0 %529, %v228
        %v531 = vpop.permute.xlu0 %530
        %533 = vset.pattern.permute.xlu0 1
        %534 = vperm.xlu0 %533, %v229
        %v535 = vpop.permute.xlu0 %534
        %537 = vset.pattern.permute.xlu0 1
        %538 = vperm.xlu0 %537, %v230
        %v539 = vpop.permute.xlu0 %538
        %541 = vset.pattern.permute.xlu0 1
        %542 = vperm.xlu0 %541, %v231
        %v543 = vpop.permute.xlu0 %542
        %545 = vset.pattern.permute.xlu0 1
        %546 = vperm.xlu0 %545, %v232
        %v547 = vpop.permute.xlu0 %546
        %549 = vset.pattern.permute.xlu0 1
        %550 = vperm.xlu0 %549, %v233
        %v551 = vpop.permute.xlu0 %550
        %553 = vset.pattern.permute.xlu0 1
        %554 = vperm.xlu0 %553, %v234
        %v555 = vpop.permute.xlu0 %554
        %557 = vset.pattern.permute.xlu0 1
        %558 = vperm.xlu0 %557, %v235
        %v559 = vpop.permute.xlu0 %558
        %561 = vset.pattern.permute.xlu0 1
        %562 = vperm.xlu0 %561, %v236
        %v563 = vpop.permute.xlu0 %562
        %565 = vset.pattern.permute.xlu0 1
        %566 = vperm.xlu0 %565, %v237
        %v567 = vpop.permute.xlu0 %566
        %569 = vset.pattern.permute.xlu0 1
        %570 = vperm.xlu0 %569, %v238
        %v571 = vpop.permute.xlu0 %570
        %573 = vset.pattern.permute.xlu0 1
        %574 = vperm.xlu0 %573, %v239
        %v575 = vpop.permute.xlu0 %574
        %577 = vset.pattern.permute.xlu0 1
        %578 = vperm.xlu0 %577, %v240
        %v579 = vpop.permute.xlu0 %578
        %581 = vset.pattern.permute.xlu0 1
        %582 = vperm.xlu0 %581, %v241
        %v583 = vpop.permute.xlu0 %582
        %585 = vset.pattern.permute.xlu0 1
        %586 = vperm.xlu0 %585, %v242
        %v587 = vpop.permute.xlu0 %586
        %589 = vset.pattern.permute.xlu0 1
        %590 = vperm.xlu0 %589, %v243
        %v591 = vpop.permute.xlu0 %590
        %593 = vset.pattern.permute.xlu0 1
        %594 = vperm.xlu0 %593, %v244
        %v595 = vpop.permute.xlu0 %594
        %597 = vset.pattern.permute.xlu0 1
        %598 = vperm.xlu0 %597, %v245
        %v599 = vpop.permute.xlu0 %598
        %601 = vset.pattern.permute.xlu0 1
        %602 = vperm.xlu0 %601, %v246
        %v603 = vpop.permute.xlu0 %602
        %605 = vset.pattern.permute.xlu0 1
        %606 = vperm.xlu0 %605, %v247
        %v607 = vpop.permute.xlu0 %606
        %609 = vset.pattern.permute.xlu0 1
        %610 = vperm.xlu0 %609, %v248
        %v611 = vpop.permute.xlu0 %610
        %v613 = vlaneseq
        %v614 = vshrl.u32 %v613, 7
        %v615 = vsub.s32 1, %v614
        %v616 = vrot.slane %v249, %v615
        %v617 = vmul.f32 %v487, %v616
        %v618 = vmul.f32 %v491, %v616
        %v619 = vmul.f32 %v495, %v616
        %v620 = vmul.f32 %v499, %v616
        %v621 = vmul.f32 %v503, %v616
        %v622 = vmul.f32 %v507, %v616
        %v623 = vmul.f32 %v511, %v616
        %v624 = vmul.f32 %v515, %v616
        %v625 = vmul.f32 %v519, %v616
        %v626 = vmul.f32 %v523, %v616
        %v627 = vmul.f32 %v527, %v616
        %v628 = vmul.f32 %v531, %v616
        %v629 = vmul.f32 %v535, %v616
        %v630 = vmul.f32 %v539, %v616
        %v631 = vmul.f32 %v543, %v616
        %v632 = vmul.f32 %v547, %v616
        %v633 = vmul.f32 %v551, %v616
        %v634 = vmul.f32 %v555, %v616
        %v635 = vmul.f32 %v559, %v616
        %v636 = vmul.f32 %v563, %v616
        %v637 = vmul.f32 %v567, %v616
        %v638 = vmul.f32 %v571, %v616
        %v639 = vmul.f32 %v575, %v616
        %v640 = vmul.f32 %v579, %v616
        %v641 = vmul.f32 %v583, %v616
        %v642 = vmul.f32 %v587, %v616
        %v643 = vmul.f32 %v591, %v616
        %v644 = vmul.f32 %v595, %v616
        %v645 = vmul.f32 %v599, %v616
        %v646 = vmul.f32 %v603, %v616
        %v647 = vmul.f32 %v607, %v616
        %v648 = vmul.f32 %v611, %v616
        %v649 = vadd.f32 %v453, %v617
        %v650 = vadd.f32 %v454, %v618
        %v651 = vadd.f32 %v455, %v619
        %v652 = vadd.f32 %v456, %v620
        %v653 = vadd.f32 %v457, %v621
        %v654 = vadd.f32 %v458, %v622
        %v655 = vadd.f32 %v459, %v623
        %v656 = vadd.f32 %v460, %v624
        %v657 = vadd.f32 %v461, %v625
        %v658 = vadd.f32 %v462, %v626
        %v659 = vadd.f32 %v463, %v627
        %v660 = vadd.f32 %v464, %v628
        %v661 = vadd.f32 %v465, %v629
        %v662 = vadd.f32 %v466, %v630
        %v663 = vadd.f32 %v467, %v631
        %v664 = vadd.f32 %v468, %v632
        %v665 = vadd.f32 %v469, %v633
        %v666 = vadd.f32 %v470, %v634
        %v667 = vadd.f32 %v471, %v635
        %v668 = vadd.f32 %v472, %v636
        %v669 = vadd.f32 %v473, %v637
        %v670 = vadd.f32 %v474, %v638
        %v671 = vadd.f32 %v475, %v639
        %v672 = vadd.f32 %v476, %v640
        %v673 = vadd.f32 %v477, %v641
        %v674 = vadd.f32 %v478, %v642
        %v675 = vadd.f32 %v479, %v643
        %v676 = vadd.f32 %v480, %v644
        %v677 = vadd.f32 %v481, %v645
        %v678 = vadd.f32 %v482, %v646
        %v679 = vadd.f32 %v483, %v647
        %v680 = vadd.f32 %v484, %v648
        %681 = vset.pattern.permute.xlu0 2
        %682 = vperm.xlu0 %681, %v217
        %v683 = vpop.permute.xlu0 %682
        %685 = vset.pattern.permute.xlu0 2
        %686 = vperm.xlu0 %685, %v218
        %v687 = vpop.permute.xlu0 %686
        %689 = vset.pattern.permute.xlu0 2
        %690 = vperm.xlu0 %689, %v219
        %v691 = vpop.permute.xlu0 %690
        %693 = vset.pattern.permute.xlu0 2
        %694 = vperm.xlu0 %693, %v220
        %v695 = vpop.permute.xlu0 %694
        %697 = vset.pattern.permute.xlu0 2
        %698 = vperm.xlu0 %697, %v221
        %v699 = vpop.permute.xlu0 %698
        %701 = vset.pattern.permute.xlu0 2
        %702 = vperm.xlu0 %701, %v222
        %v703 = vpop.permute.xlu0 %702
        %705 = vset.pattern.permute.xlu0 2
        %706 = vperm.xlu0 %705, %v223
        %v707 = vpop.permute.xlu0 %706
        %709 = vset.pattern.permute.xlu0 2
        %710 = vperm.xlu0 %709, %v224
        %v711 = vpop.permute.xlu0 %710
        %713 = vset.pattern.permute.xlu0 2
        %714 = vperm.xlu0 %713, %v225
        %v715 = vpop.permute.xlu0 %714
        %717 = vset.pattern.permute.xlu0 2
        %718 = vperm.xlu0 %717, %v226
        %v719 = vpop.permute.xlu0 %718
        %721 = vset.pattern.permute.xlu0 2
        %722 = vperm.xlu0 %721, %v227
        %v723 = vpop.permute.xlu0 %722
        %725 = vset.pattern.permute.xlu0 2
        %726 = vperm.xlu0 %725, %v228
        %v727 = vpop.permute.xlu0 %726
        %729 = vset.pattern.permute.xlu0 2
        %730 = vperm.xlu0 %729, %v229
        %v731 = vpop.permute.xlu0 %730
        %733 = vset.pattern.permute.xlu0 2
        %734 = vperm.xlu0 %733, %v230
        %v735 = vpop.permute.xlu0 %734
        %737 = vset.pattern.permute.xlu0 2
        %738 = vperm.xlu0 %737, %v231
        %v739 = vpop.permute.xlu0 %738
        %741 = vset.pattern.permute.xlu0 2
        %742 = vperm.xlu0 %741, %v232
        %v743 = vpop.permute.xlu0 %742
        %745 = vset.pattern.permute.xlu0 2
        %746 = vperm.xlu0 %745, %v233
        %v747 = vpop.permute.xlu0 %746
        %749 = vset.pattern.permute.xlu0 2
        %750 = vperm.xlu0 %749, %v234
        %v751 = vpop.permute.xlu0 %750
        %753 = vset.pattern.permute.xlu0 2
        %754 = vperm.xlu0 %753, %v235
        %v755 = vpop.permute.xlu0 %754
        %757 = vset.pattern.permute.xlu0 2
        %758 = vperm.xlu0 %757, %v236
        %v759 = vpop.permute.xlu0 %758
        %761 = vset.pattern.permute.xlu0 2
        %762 = vperm.xlu0 %761, %v237
        %v763 = vpop.permute.xlu0 %762
        %765 = vset.pattern.permute.xlu0 2
        %766 = vperm.xlu0 %765, %v238
        %v767 = vpop.permute.xlu0 %766
        %769 = vset.pattern.permute.xlu0 2
        %770 = vperm.xlu0 %769, %v239
        %v771 = vpop.permute.xlu0 %770
        %773 = vset.pattern.permute.xlu0 2
        %774 = vperm.xlu0 %773, %v240
        %v775 = vpop.permute.xlu0 %774
        %777 = vset.pattern.permute.xlu0 2
        %778 = vperm.xlu0 %777, %v241
        %v779 = vpop.permute.xlu0 %778
        %781 = vset.pattern.permute.xlu0 2
        %782 = vperm.xlu0 %781, %v242
        %v783 = vpop.permute.xlu0 %782
        %785 = vset.pattern.permute.xlu0 2
        %786 = vperm.xlu0 %785, %v243
        %v787 = vpop.permute.xlu0 %786
        %789 = vset.pattern.permute.xlu0 2
        %790 = vperm.xlu0 %789, %v244
        %v791 = vpop.permute.xlu0 %790
        %793 = vset.pattern.permute.xlu0 2
        %794 = vperm.xlu0 %793, %v245
        %v795 = vpop.permute.xlu0 %794
        %797 = vset.pattern.permute.xlu0 2
        %798 = vperm.xlu0 %797, %v246
        %v799 = vpop.permute.xlu0 %798
        %801 = vset.pattern.permute.xlu0 2
        %802 = vperm.xlu0 %801, %v247
        %v803 = vpop.permute.xlu0 %802
        %805 = vset.pattern.permute.xlu0 2
        %806 = vperm.xlu0 %805, %v248
        %v807 = vpop.permute.xlu0 %806
        %v809 = vlaneseq
        %v810 = vshrl.u32 %v809, 7
        %v811 = vsub.s32 2, %v810
        %v812 = vrot.slane %v249, %v811
        %v813 = vmul.f32 %v683, %v812
        %v814 = vmul.f32 %v687, %v812
        %v815 = vmul.f32 %v691, %v812
        %v816 = vmul.f32 %v695, %v812
        %v817 = vmul.f32 %v699, %v812
        %v818 = vmul.f32 %v703, %v812
        %v819 = vmul.f32 %v707, %v812
        %v820 = vmul.f32 %v711, %v812
        %v821 = vmul.f32 %v715, %v812
        %v822 = vmul.f32 %v719, %v812
        %v823 = vmul.f32 %v723, %v812
        %v824 = vmul.f32 %v727, %v812
        %v825 = vmul.f32 %v731, %v812
        %v826 = vmul.f32 %v735, %v812
        %v827 = vmul.f32 %v739, %v812
        %v828 = vmul.f32 %v743, %v812
        %v829 = vmul.f32 %v747, %v812
        %v830 = vmul.f32 %v751, %v812
        %v831 = vmul.f32 %v755, %v812
        %v832 = vmul.f32 %v759, %v812
        %v833 = vmul.f32 %v763, %v812
        %v834 = vmul.f32 %v767, %v812
        %v835 = vmul.f32 %v771, %v812
        %v836 = vmul.f32 %v775, %v812
        %v837 = vmul.f32 %v779, %v812
        %v838 = vmul.f32 %v783, %v812
        %v839 = vmul.f32 %v787, %v812
        %v840 = vmul.f32 %v791, %v812
        %v841 = vmul.f32 %v795, %v812
        %v842 = vmul.f32 %v799, %v812
        %v843 = vmul.f32 %v803, %v812
        %v844 = vmul.f32 %v807, %v812
        %v845 = vadd.f32 %v649, %v813
        %v846 = vadd.f32 %v650, %v814
        %v847 = vadd.f32 %v651, %v815
        %v848 = vadd.f32 %v652, %v816
        %v849 = vadd.f32 %v653, %v817
        %v850 = vadd.f32 %v654, %v818
        %v851 = vadd.f32 %v655, %v819
        %v852 = vadd.f32 %v656, %v820
        %v853 = vadd.f32 %v657, %v821
        %v854 = vadd.f32 %v658, %v822
        %v855 = vadd.f32 %v659, %v823
        %v856 = vadd.f32 %v660, %v824
        %v857 = vadd.f32 %v661, %v825
        %v858 = vadd.f32 %v662, %v826
        %v859 = vadd.f32 %v663, %v827
        %v860 = vadd.f32 %v664, %v828
        %v861 = vadd.f32 %v665, %v829
        %v862 = vadd.f32 %v666, %v830
        %v863 = vadd.f32 %v667, %v831
        %v864 = vadd.f32 %v668, %v832
        %v865 = vadd.f32 %v669, %v833
        %v866 = vadd.f32 %v670, %v834
        %v867 = vadd.f32 %v671, %v835
        %v868 = vadd.f32 %v672, %v836
        %v869 = vadd.f32 %v673, %v837
        %v870 = vadd.f32 %v674, %v838
        %v871 = vadd.f32 %v675, %v839
        %v872 = vadd.f32 %v676, %v840
        %v873 = vadd.f32 %v677, %v841
        %v874 = vadd.f32 %v678, %v842
        %v875 = vadd.f32 %v679, %v843
        %v876 = vadd.f32 %v680, %v844
        %877 = vset.pattern.permute.xlu0 3
        %878 = vperm.xlu0 %877, %v217
        %v879 = vpop.permute.xlu0 %878
        %881 = vset.pattern.permute.xlu0 3
        %882 = vperm.xlu0 %881, %v218
        %v883 = vpop.permute.xlu0 %882
        %885 = vset.pattern.permute.xlu0 3
        %886 = vperm.xlu0 %885, %v219
        %v887 = vpop.permute.xlu0 %886
        %889 = vset.pattern.permute.xlu0 3
        %890 = vperm.xlu0 %889, %v220
        %v891 = vpop.permute.xlu0 %890
        %893 = vset.pattern.permute.xlu0 3
        %894 = vperm.xlu0 %893, %v221
        %v895 = vpop.permute.xlu0 %894
        %897 = vset.pattern.permute.xlu0 3
        %898 = vperm.xlu0 %897, %v222
        %v899 = vpop.permute.xlu0 %898
        %901 = vset.pattern.permute.xlu0 3
        %902 = vperm.xlu0 %901, %v223
        %v903 = vpop.permute.xlu0 %902
        %905 = vset.pattern.permute.xlu0 3
        %906 = vperm.xlu0 %905, %v224
        %v907 = vpop.permute.xlu0 %906
        %909 = vset.pattern.permute.xlu0 3
        %910 = vperm.xlu0 %909, %v225
        %v911 = vpop.permute.xlu0 %910
        %913 = vset.pattern.permute.xlu0 3
        %914 = vperm.xlu0 %913, %v226
        %v915 = vpop.permute.xlu0 %914
        %917 = vset.pattern.permute.xlu0 3
        %918 = vperm.xlu0 %917, %v227
        %v919 = vpop.permute.xlu0 %918
        %921 = vset.pattern.permute.xlu0 3
        %922 = vperm.xlu0 %921, %v228
        %v923 = vpop.permute.xlu0 %922
        %925 = vset.pattern.permute.xlu0 3
        %926 = vperm.xlu0 %925, %v229
        %v927 = vpop.permute.xlu0 %926
        %929 = vset.pattern.permute.xlu0 3
        %930 = vperm.xlu0 %929, %v230
        %v931 = vpop.permute.xlu0 %930
        %933 = vset.pattern.permute.xlu0 3
        %934 = vperm.xlu0 %933, %v231
        %v935 = vpop.permute.xlu0 %934
        %937 = vset.pattern.permute.xlu0 3
        %938 = vperm.xlu0 %937, %v232
        %v939 = vpop.permute.xlu0 %938
        %941 = vset.pattern.permute.xlu0 3
        %942 = vperm.xlu0 %941, %v233
        %v943 = vpop.permute.xlu0 %942
        %945 = vset.pattern.permute.xlu0 3
        %946 = vperm.xlu0 %945, %v234
        %v947 = vpop.permute.xlu0 %946
        %949 = vset.pattern.permute.xlu0 3
        %950 = vperm.xlu0 %949, %v235
        %v951 = vpop.permute.xlu0 %950
        %953 = vset.pattern.permute.xlu0 3
        %954 = vperm.xlu0 %953, %v236
        %v955 = vpop.permute.xlu0 %954
        %957 = vset.pattern.permute.xlu0 3
        %958 = vperm.xlu0 %957, %v237
        %v959 = vpop.permute.xlu0 %958
        %961 = vset.pattern.permute.xlu0 3
        %962 = vperm.xlu0 %961, %v238
        %v963 = vpop.permute.xlu0 %962
        %965 = vset.pattern.permute.xlu0 3
        %966 = vperm.xlu0 %965, %v239
        %v967 = vpop.permute.xlu0 %966
        %969 = vset.pattern.permute.xlu0 3
        %970 = vperm.xlu0 %969, %v240
        %v971 = vpop.permute.xlu0 %970
        %973 = vset.pattern.permute.xlu0 3
        %974 = vperm.xlu0 %973, %v241
        %v975 = vpop.permute.xlu0 %974
        %977 = vset.pattern.permute.xlu0 3
        %978 = vperm.xlu0 %977, %v242
        %v979 = vpop.permute.xlu0 %978
        %981 = vset.pattern.permute.xlu0 3
        %982 = vperm.xlu0 %981, %v243
        %v983 = vpop.permute.xlu0 %982
        %985 = vset.pattern.permute.xlu0 3
        %986 = vperm.xlu0 %985, %v244
        %v987 = vpop.permute.xlu0 %986
        %989 = vset.pattern.permute.xlu0 3
        %990 = vperm.xlu0 %989, %v245
        %v991 = vpop.permute.xlu0 %990
        %993 = vset.pattern.permute.xlu0 3
        %994 = vperm.xlu0 %993, %v246
        %v995 = vpop.permute.xlu0 %994
        %997 = vset.pattern.permute.xlu0 3
        %998 = vperm.xlu0 %997, %v247
        %v999 = vpop.permute.xlu0 %998
        %1001 = vset.pattern.permute.xlu0 3
        %1002 = vperm.xlu0 %1001, %v248
        %v1003 = vpop.permute.xlu0 %1002
        %v1005 = vlaneseq
        %v1006 = vshrl.u32 %v1005, 7
        %v1007 = vsub.s32 3, %v1006
        %v1008 = vrot.slane %v249, %v1007
        %v1009 = vmul.f32 %v879, %v1008
        %v1010 = vmul.f32 %v883, %v1008
        %v1011 = vmul.f32 %v887, %v1008
        %v1012 = vmul.f32 %v891, %v1008
        %v1013 = vmul.f32 %v895, %v1008
        %v1014 = vmul.f32 %v899, %v1008
        %v1015 = vmul.f32 %v903, %v1008
        %v1016 = vmul.f32 %v907, %v1008
        %v1017 = vmul.f32 %v911, %v1008
        %v1018 = vmul.f32 %v915, %v1008
        %v1019 = vmul.f32 %v919, %v1008
        %v1020 = vmul.f32 %v923, %v1008
        %v1021 = vmul.f32 %v927, %v1008
        %v1022 = vmul.f32 %v931, %v1008
        %v1023 = vmul.f32 %v935, %v1008
        %v1024 = vmul.f32 %v939, %v1008
        %v1025 = vmul.f32 %v943, %v1008
        %v1026 = vmul.f32 %v947, %v1008
        %v1027 = vmul.f32 %v951, %v1008
        %v1028 = vmul.f32 %v955, %v1008
        %v1029 = vmul.f32 %v959, %v1008
        %v1030 = vmul.f32 %v963, %v1008
        %v1031 = vmul.f32 %v967, %v1008
        %v1032 = vmul.f32 %v971, %v1008
        %v1033 = vmul.f32 %v975, %v1008
        %v1034 = vmul.f32 %v979, %v1008
        %v1035 = vmul.f32 %v983, %v1008
        %v1036 = vmul.f32 %v987, %v1008
        %v1037 = vmul.f32 %v991, %v1008
        %v1038 = vmul.f32 %v995, %v1008
        %v1039 = vmul.f32 %v999, %v1008
        %v1040 = vmul.f32 %v1003, %v1008
        %v1041 = vadd.f32 %v845, %v1009
        %v1042 = vadd.f32 %v846, %v1010
        %v1043 = vadd.f32 %v847, %v1011
        %v1044 = vadd.f32 %v848, %v1012
        %v1045 = vadd.f32 %v849, %v1013
        %v1046 = vadd.f32 %v850, %v1014
        %v1047 = vadd.f32 %v851, %v1015
        %v1048 = vadd.f32 %v852, %v1016
        %v1049 = vadd.f32 %v853, %v1017
        %v1050 = vadd.f32 %v854, %v1018
        %v1051 = vadd.f32 %v855, %v1019
        %v1052 = vadd.f32 %v856, %v1020
        %v1053 = vadd.f32 %v857, %v1021
        %v1054 = vadd.f32 %v858, %v1022
        %v1055 = vadd.f32 %v859, %v1023
        %v1056 = vadd.f32 %v860, %v1024
        %v1057 = vadd.f32 %v861, %v1025
        %v1058 = vadd.f32 %v862, %v1026
        %v1059 = vadd.f32 %v863, %v1027
        %v1060 = vadd.f32 %v864, %v1028
        %v1061 = vadd.f32 %v865, %v1029
        %v1062 = vadd.f32 %v866, %v1030
        %v1063 = vadd.f32 %v867, %v1031
        %v1064 = vadd.f32 %v868, %v1032
        %v1065 = vadd.f32 %v869, %v1033
        %v1066 = vadd.f32 %v870, %v1034
        %v1067 = vadd.f32 %v871, %v1035
        %v1068 = vadd.f32 %v872, %v1036
        %v1069 = vadd.f32 %v873, %v1037
        %v1070 = vadd.f32 %v874, %v1038
        %v1071 = vadd.f32 %v875, %v1039
        %v1072 = vadd.f32 %v876, %v1040
        %1073 = vst [vmem:[%s202] sm:$0xff] %v1041
        %1074 = vst [vmem:[%s202 + $0x8] sm:$0xff] %v1042
        %1075 = vst [vmem:[%s202 + $0x10] sm:$0xff] %v1043
        %1076 = vst [vmem:[%s202 + $0x18] sm:$0xff] %v1044
        %1077 = vst [vmem:[%s202 + $0x20] sm:$0xff] %v1045
        %1078 = vst [vmem:[%s202 + $0x28] sm:$0xff] %v1046
        %1079 = vst [vmem:[%s202 + $0x30] sm:$0xff] %v1047
        %1080 = vst [vmem:[%s202 + $0x38] sm:$0xff] %v1048
        %1081 = vst [vmem:[%s202 + $0x40] sm:$0xff] %v1049
        %1082 = vst [vmem:[%s202 + $0x48] sm:$0xff] %v1050
        %1083 = vst [vmem:[%s202 + $0x50] sm:$0xff] %v1051
        %1084 = vst [vmem:[%s202 + $0x58] sm:$0xff] %v1052
        %1085 = vst [vmem:[%s202 + $0x60] sm:$0xff] %v1053
        %1086 = vst [vmem:[%s202 + $0x68] sm:$0xff] %v1054
        %1087 = vst [vmem:[%s202 + $0x70] sm:$0xff] %v1055
        %1088 = vst [vmem:[%s202 + $0x78] sm:$0xff] %v1056
        %1089 = vst [vmem:[%s202 + $0x80] sm:$0xff] %v1057
        %1090 = vst [vmem:[%s202 + $0x88] sm:$0xff] %v1058
        %1091 = vst [vmem:[%s202 + $0x90] sm:$0xff] %v1059
        %1092 = vst [vmem:[%s202 + $0x98] sm:$0xff] %v1060
        %1093 = vst [vmem:[%s202 + $0xa0] sm:$0xff] %v1061
        %1094 = vst [vmem:[%s202 + $0xa8] sm:$0xff] %v1062
        %1095 = vst [vmem:[%s202 + $0xb0] sm:$0xff] %v1063
        %1096 = vst [vmem:[%s202 + $0xb8] sm:$0xff] %v1064
        %1097 = vst [vmem:[%s202 + $0xc0] sm:$0xff] %v1065
        %1098 = vst [vmem:[%s202 + $0xc8] sm:$0xff] %v1066
        %1099 = vst [vmem:[%s202 + $0xd0] sm:$0xff] %v1067
        %1100 = vst [vmem:[%s202 + $0xd8] sm:$0xff] %v1068
        %1101 = vst [vmem:[%s202 + $0xe0] sm:$0xff] %v1069
        %1102 = vst [vmem:[%s202 + $0xe8] sm:$0xff] %v1070
        %1103 = vst [vmem:[%s202 + $0xf0] sm:$0xff] %v1071
        %1104 = vst [vmem:[%s202 + $0xf8] sm:$0xff] %v1072
        %s1105 = sand.u32 %s117, 1
        %s1106 = scalar_lea.sflag [#allocation3], %s1105
        %s1107 = sand.u32 %s117, 1
        %s1108 = smul.addr %s1107, 256
        %s1109 = scalar_lea.vmem [#allocation2], %s1108
        // Predicated region
        $region33: #{tpu_custom_call.1} parent=31 // pred_check
          %p1110 = pneg %p127
        $region34: #{tpu_custom_call.1} parent=31 // pred_check_branch
          %1112 = sbr.rel (%p1110) target = $region36
        $region35: #{tpu_custom_call.1} parent=31 // pred_region
          %s1113 = smul.u32 32, %s21
          %s1115 = ssub.s32 4096, 4096
          %1116 = vsyncadd %s1106, %s1115
          %s1117 = sadd.s32 %s22, %s1113
          %s1118 = smul.addr %s1117, 128
          %s1119 = scalar_lea.hbm %s3, %s1118
          %s1120 = sshll.u32 %s1109, 4
          %s1121 = int_to_ptr.vmem [resolvable:$true] %s1120
          %1126 = dma.vmem_to_hbm [thread:$0]  %s1121, 4096, %s1119, %s1106, 128, 128, 8
        $region36: #{tpu_custom_call.1} parent=31 // pred_fallthru
          _
      $region32: #{tpu_custom_call.1} parent=5 // pred_fallthru
        _
      %p1127 = scmp.le.s32.totalorder 2, %s12
      // Predicated region
      $region37: #{tpu_custom_call.1} parent=5 // pred_check
        %p1128 = pneg %p1127
      $region38: #{tpu_custom_call.1} parent=5 // pred_check_branch
        %1130 = sbr.rel (%p1128) target = $region40
      $region39: #{tpu_custom_call.1} parent=5 // pred_region
        %s1131 = ssub.s32 %s12, 2
        // Predicated region
        $region41: #{tpu_custom_call.1} parent=39 // pred_check
          %p1132 = pneg %p133
        $region42: #{tpu_custom_call.1} parent=39 // pred_check_branch
          %1134 = sbr.rel (%p1132) target = $region44
        $region43: #{tpu_custom_call.1} parent=39 // pred_region
          %s1135 = sand.u32 %s118, 1
          %s1136 = scalar_lea.sflag [#allocation3], %s1135
          %s1137 = sand.u32 %s118, 1
          %s1138 = smul.addr %s1137, 256
          %s1139 = scalar_lea.vmem [#allocation2], %s1138
          %1140 = dma.done %s1136, 4096
        $region44: #{tpu_custom_call.1} parent=39 // pred_fallthru
          _
      $region40: #{tpu_custom_call.1} parent=5 // pred_fallthru
        _
    $region6: #{tpu_custom_call.1} parent=1 // loop_footer
      %s16 = sadd.s32 1, %s12
    $region7: #{tpu_custom_call.1} parent=1 // loop_footer_branch
      %11 = sbr.rel target = $region3
    $region8: #{tpu_custom_call.1} parent=1 // loop_exit
      _
    %1141 = vsyncpa [#allocation3], 1
    %s1142 = scalar_lea.sflag [#allocation3], 1
    %1143 = vsyncpa %s1142, 1

</llo_original>
